<compile_context>
chip_gen: v7x
topology: tpu7x:2x2x1
jax: 0.10.0
libtpu: 0.0.40
codegen_flags: <defaults>
</compile_context>

<pallas_src>
import functools

import numpy as np
import jax
import jax.numpy as jnp
from jax.experimental import pallas as pl
from jax.experimental.pallas import tpu as pltpu

KERNEL_SIZE = 3
STRIDE = 1
DILATION = 2
PAD = (KERNEL_SIZE - 1) * DILATION // 2  # == DILATION for kernel_size=3
LANE = 128


def _round_up(n, m):
    return (n + m - 1) // m * m


def _vmem_capacity_bytes():
    try:
        cap = getattr(pltpu.get_tpu_info(), "vmem_capacity_bytes", None)
        if cap:
            return int(cap)
    except Exception:
        pass
    return 64 << 20  # conservative fallback (v7x per-TensorCore VMEM)


def _mxu_is_256_wide():
    # conv1+residual RHS fusion only pays off on 256-wide MXUs (v6e / v7x);
    # on v5e's 128-wide MXU it would only add zero MACs.
    try:
        dev = jax.devices()[0]
        if dev.platform != "tpu":
            return False
        kind = dev.device_kind.lower()
        return not any(v in kind for v in ("v2", "v3", "v4", "v5"))
    except Exception:
        return False


def temporal_block_kernel(*refs, tile_l, dil, seq_len, n_out,
                          fuse_residual, has_downsample):
    """One (batch, L-tile) grid step.  Channel dims padded to 128.

    x_ref   : (1, 1, tile_l + 4*dil, Cinp)  bf16 halo'd input slab
    w1_ref  : (3*Cinp, Coutp)  [or (3*Cinp, 2*Coutp) when the residual is fused]
    b1_ref  : (1, Coutp) f32
    w2_ref  : (3*Coutp, Coutp) bf16
    b2_ref  : (1, Coutp) f32
    wd_ref  : (Cinp, Coutp) bf16   (only when downsample and not fused)
    bd_ref  : (1, Coutp) f32       (only when downsample)
    out_ref : (1, tile_l, Coutp)
    """
    if fuse_residual:
        x_ref, w1_ref, b1_ref, w2_ref, b2_ref, bd_ref, out_ref = refs
        wd_ref = None
    elif has_downsample:
        x_ref, w1_ref, b1_ref, w2_ref, b2_ref, wd_ref, bd_ref, out_ref = refs
    else:
        x_ref, w1_ref, b1_ref, w2_ref, b2_ref, out_ref = refs
        wd_ref = bd_ref = None

    d, tl = dil, tile_l
    j = pl.program_id(1)                       # L-tile index
    xb = x_ref[0, 0]                           # (tl + 4d, Cinp) bf16

    def taps(h, rows):
        # im2col of the K=3 dilated taps along the lane axis: result row r
        # reads h[r], h[r+d], h[r+2d]  (== signal[g-d], signal[g], signal[g+d]).
        # TODO(synk): check a bundle dump for XLU relayouts on these d=2 row
        #             slices; switch to pltpu.roll + boundary mask if XLU-bound.
        return jnp.concatenate(
            [h[0:rows, :], h[d:rows + d, :], h[2 * d:rows + 2 * d, :]], axis=1)

    # ---- conv1 over the h1 halo range [j*tl - d, j*tl + tl + d) ----
    n1 = tl + 2 * d
    p1 = jnp.dot(taps(xb, n1), w1_ref[...],
                 preferred_element_type=jnp.float32)            # (n1, Coutp | 2*Coutp)
    h1 = jnp.maximum(p1[:, :n_out] + b1_ref[...], 0.0)          # ReLU; dropout1 = id (eval)

    # conv2's 'same' padding: h1 outside the true sequence [0, L) must be zero
    # (not conv1-of-padding, which is nonzero because of bias + ReLU).
    g = jax.lax.broadcasted_iota(jnp.int32, (n1, n_out), 0) + (j * tl - d)
    h1 = jnp.where(jnp.logical_and(g >= 0, g < seq_len), h1, 0.0)

    # ---- residual branch for output rows [j*tl, j*tl + tl) ----
    # (computed before conv2's im2col so x's live range ends early)
    if fuse_residual:
        res = p1[d:d + tl, n_out:] + bd_ref[...]
    elif has_downsample:
        res = jnp.dot(xb[2 * d:2 * d + tl, :], wd_ref[...],
                      preferred_element_type=jnp.float32) + bd_ref[...]
    else:
        res = xb[2 * d:2 * d + tl, :].astype(jnp.float32)        # identity (Cin == Cout)

    # ---- conv2 ----
    h1b = h1.astype(xb.dtype)
    h2 = jnp.dot(taps(h1b, tl), w2_ref[...],
                 preferred_element_type=jnp.float32)
    h2 = jnp.maximum(h2 + b2_ref[...], 0.0)                      # ReLU; dropout2 = id (eval)

    out_ref[0] = jnp.maximum(h2 + res, 0.0).astype(out_ref.dtype)   # final ReLU, lane-dense


def temporal_block_nlc(x_nlc, params, *, compute_dtype=jnp.bfloat16,
                       out_dtype=None, max_tile_l=1024):
    """TemporalBlock forward, NLC (channels-last) layout end to end.

    x_nlc: (B, L, Cin).  Returns (B, L, Cout) in `out_dtype` (default bf16).
    params = (w1, b1, w2, b2, wd, bd); w1:(K,Cin,Cout), w2:(K,Cout,Cout),
    biases (1,C); wd/bd are None when Cin == Cout (identity residual).
    """
    w1, b1, w2, b2, wd, bd = params
    out_dtype = compute_dtype if out_dtype is None else out_dtype
    B, L, Cin = x_nlc.shape
    K = w1.shape[0]
    Cout = w1.shape[2]
    assert K == KERNEL_SIZE and PAD == DILATION
    has_downsample = wd is not None
    if not has_downsample:
        assert Cin == Cout, "identity residual requires Cin == Cout"

    D = DILATION
    Cinp = _round_up(Cin, LANE)
    Coutp = _round_up(Cout, LANE)
    fuse_residual = has_downsample and (Coutp == LANE) and _mxu_is_256_wide()

    # ---- weight packing (im2col layout: K-major rows, channels padded) ----
    def pack_conv(w, ci, cip, co, cop):
        wp = jnp.pad(w, ((0, 0), (0, cip - ci), (0, cop - co)))
        return wp.reshape(K * cip, cop)

    w1p = pack_conv(w1, Cin, Cinp, Cout, Coutp)                      # f32 (3*Cinp, Coutp)
    w2c = pack_conv(w2, Cout, Coutp, Cout, Coutp).astype(compute_dtype)
    b1p = jnp.pad(b1, ((0, 0), (0, Coutp - Cout))).astype(jnp.float32)
    b2p = jnp.pad(b2, ((0, 0), (0, Coutp - Cout))).astype(jnp.float32)

    if has_downsample:
        wdp = jnp.pad(wd, ((0, Cinp - Cin), (0, Coutp - Cout)))
        bdp = jnp.pad(bd, ((0, 0), (0, Coutp - Cout))).astype(jnp.float32)

    if fuse_residual:
        # Fused RHS (3*Cinp, 2*Coutp): left half = conv1 weights, right half =
        # 1x1 residual weights placed only on the middle-tap rows, so conv1 and
        # the residual come out of ONE full-width MXU matmul on v6e/v7x.
        zeros = jnp.zeros((Cinp, Coutp), w1p.dtype)
        w1c = jnp.concatenate(
            [w1p, jnp.concatenate([zeros, wdp, zeros], axis=0)], axis=1
        ).astype(compute_dtype)
        weight_inputs = [w1c, b1p, w2c, b2p, bdp]
    elif has_downsample:
        w1c = w1p.astype(compute_dtype)
        weight_inputs = [w1c, b1p, w2c, b2p, wdp.astype(compute_dtype), bdp]
    else:
        w1c = w1p.astype(compute_dtype)
        weight_inputs = [w1c, b1p, w2c, b2p]

    w_bytes = sum(int(a.size) * a.dtype.itemsize for a in weight_inputs)
    compute_bytes = np.dtype(compute_dtype).itemsize
    out_bytes = np.dtype(out_dtype).itemsize
    wcols = w1c.shape[1]

    # ---- L-tile selection against the real per-generation VMEM capacity ----
    cap = _vmem_capacity_bytes()
    budget = int(cap * 0.85)

    def vmem_est(tl_):
        n1 = tl_ + 2 * D
        x_blk = (tl_ + 4 * D) * Cinp * compute_bytes
        o_blk = tl_ * Coutp * out_bytes
        tmp = (n1 * 3 * Cinp * compute_bytes      # conv1 im2col slab (bf16)
               + n1 * wcols * 4                   # conv1 (or fused) f32 result
               + n1 * Coutp * compute_bytes       # masked h1 in bf16
               + tl_ * 3 * Coutp * compute_bytes  # conv2 im2col slab (bf16)
               + tl_ * Coutp * 4 * 2)             # h2 + res in f32
        return 2 * (x_blk + o_blk) + w_bytes + tmp + (2 << 20)

    tl = max(8, min(_round_up(max_tile_l, 8), _round_up(L, 8)))
    while tl > 8 and vmem_est(tl) > budget:
        tl = max(8, _round_up(tl // 2, 8))
    nl = pl.cdiv(L, tl)
    l_t = nl * tl
    tlh = tl + 4 * D
    vmem_limit = int(min(max(vmem_est(tl) * 1.25, 16 << 20), cap * 0.9))

    # ---- one fused preprocessing pass: bf16 cast + channel/length pad +
    #      overlapping halo-tile gather (duplicates only 4*D rows per tile) ----
    # TODO(synk): replace the wrapper gather with pl.Element-offset BlockSpecs
    #             (or manual DMA) to avoid even that small HBM duplication.
    xc = x_nlc.astype(compute_dtype)
    xp = jnp.pad(xc, ((0, 0), (2 * D, l_t - L + 2 * D), (0, Cinp - Cin)))
    idx = (jnp.arange(nl) * tl)[:, None] + jnp.arange(tlh)[None, :]
    x_tiled = xp[:, idx, :]                       # (B, nl, tlh, Cinp)

    kernel = functools.partial(
        temporal_block_kernel, tile_l=tl, dil=D, seq_len=L, n_out=Coutp,
        fuse_residual=fuse_residual, has_downsample=has_downsample)

    flops = 2 * B * nl * ((tl + 2 * D) * 3 * Cinp * wcols + tl * 3 * Coutp * Coutp)
    if has_downsample and not fuse_residual:
        flops += 2 * B * nl * tl * Cinp * Coutp
    bytes_accessed = (int(x_tiled.size) * compute_bytes + w_bytes
                      + B * l_t * Coutp * out_bytes)
    cost = pl.CostEstimate(flops=int(flops), transcendentals=0,
                           bytes_accessed=int(bytes_accessed))

    def call(buffer_weights):
        def w_spec(arr):
            kw = {"pipeline_mode": pl.Buffered(1)} if buffer_weights else {}
            return pl.BlockSpec(arr.shape, lambda b, j: (0, 0), **kw)

        in_specs = [pl.BlockSpec((1, 1, tlh, Cinp), lambda b, j: (b, j, 0, 0))]
        in_specs += [w_spec(a) for a in weight_inputs]
        return pl.pallas_call(
            kernel,
            out_shape=jax.ShapeDtypeStruct((B, l_t, Coutp), out_dtype),
            grid_spec=pltpu.PrefetchScalarGridSpec(
                num_scalar_prefetch=0,
                grid=(B, nl),
                in_specs=in_specs,
                out_specs=pl.BlockSpec((1, tl, Coutp), lambda b, j: (b, j, 0)),
            ),
            compiler_params=pltpu.CompilerParams(
                dimension_semantics=("parallel", "parallel"),
                vmem_limit_bytes=vmem_limit,
            ),
            cost_estimate=cost,
        )(x_tiled, *weight_inputs)

    try:
        out_p = call(buffer_weights=True)
    except Exception:
        # pipeline_mode=pl.Buffered(1) unsupported on this jax version:
        # fall back to default (double-buffered) weight blocks.
        out_p = call(buffer_weights=False)

    return out_p[:, :L, :Cout]          # drop length/channel zero padding


def ref_forward_nlc(x_nlc, params, *, compute_dtype=jnp.bfloat16):
    """Pure-JAX reference mirroring the PyTorch module (and the kernel's bf16 casts)."""
    w1, b1, w2, b2, wd, bd = params
    q = lambda a: a.astype(compute_dtype).astype(jnp.float32)

    def conv1d(x, w_kio, b, dilation, padding):
        y = jax.lax.conv_general_dilated(
            x, w_kio, window_strides=(STRIDE,), padding=[(padding, padding)],
            rhs_dilation=(dilation,),
            dimension_numbers=("NHC", "HIO", "NHC"))
        return y + b.reshape(1, 1, -1)

    xq = q(x_nlc)
    h = jnp.maximum(conv1d(xq, q(w1), b1, DILATION, PAD), 0.0)
    h = q(h)                                 # kernel casts h1 to bf16 before conv2
    h = jnp.maximum(conv1d(h, q(w2), b2, DILATION, PAD), 0.0)
    res = xq if wd is None else conv1d(xq, q(wd)[None, :, :], bd, 1, 0)
    return jnp.maximum(h + res, 0.0)


if __name__ == "__main__":
    def make_params(key, cin, cout):
        ks = jax.random.split(key, 6)
        w1 = 0.3 * jax.random.normal(ks[0], (KERNEL_SIZE, cin, cout), jnp.float32)
        b1 = 0.1 * jax.random.normal(ks[1], (1, cout), jnp.float32)
        w2 = 0.3 * jax.random.normal(ks[2], (KERNEL_SIZE, cout, cout), jnp.float32)
        b2 = 0.1 * jax.random.normal(ks[3], (1, cout), jnp.float32)
        if cin != cout:                       # mirrors the PyTorch downsample rule
            wd = 0.3 * jax.random.normal(ks[4], (cin, cout), jnp.float32)
            bd = 0.1 * jax.random.normal(ks[5], (1, cout), jnp.float32)
        else:
            wd = bd = None
        return (w1, b1, w2, b2, wd, bd)

    key = jax.random.PRNGKey(0)
    k1, k2, k3, k4 = jax.random.split(key, 4)

    # Case 1: Cin != Cout (1x1-conv residual), single L tile.
    B, Cin, Cout, L = 2, 4, 8, 16
    x = jax.random.normal(k1, (B, L, Cin), jnp.float32)       # NLC layout end to end
    params = make_params(k2, Cin, Cout)
    out = temporal_block_nlc(x, params)
    jax.block_until_ready(out)
    ref = ref_forward_nlc(x, params)
    assert out.shape == (B, L, Cout), out.shape
    assert jnp.allclose(out.astype(jnp.float32), ref, atol=5e-2, rtol=5e-2), \
        "mismatch vs JAX reference (downsample case)"

    # Case 2: Cin == Cout (identity residual); small forced tile so the
    # multi-L-tile halo + boundary-mask path is exercised.
    B2, C2, L2 = 1, 8, 40
    x2 = jax.random.normal(k3, (B2, L2, C2), jnp.float32)
    params2 = make_params(k4, C2, C2)
    out2 = temporal_block_nlc(x2, params2, max_tile_l=16)     # 3 L-tiles of 16 rows
    jax.block_until_ready(out2)
    ref2 = ref_forward_nlc(x2, params2)
    assert out2.shape == (B2, L2, C2), out2.shape
    assert jnp.allclose(out2.astype(jnp.float32), ref2, atol=5e-2, rtol=5e-2), \
        "mismatch vs JAX reference (identity-residual / multi-tile case)"

    print("KERNEL_OK")
</pallas_src>

<mosaic_0001>
module attributes {stable_mosaic.version = 11 : i64} {
  func.func @temporal_block_kernel(%arg0: i32, %arg1: i32, %arg2: memref<1x1x24x128xbf16, #tpu.memory_space<vmem>>, %arg3: memref<384x128xbf16, #tpu.memory_space<vmem>>, %arg4: memref<1x128xf32, #tpu.memory_space<vmem>>, %arg5: memref<384x128xbf16, #tpu.memory_space<vmem>>, %arg6: memref<1x128xf32, #tpu.memory_space<vmem>>, %arg7: memref<128x128xbf16, #tpu.memory_space<vmem>>, %arg8: memref<1x128xf32, #tpu.memory_space<vmem>>, %arg9: memref<1x16x128xbf16, #tpu.memory_space<vmem>>) attributes {dimension_semantics = [#tpu.dimension_semantics<parallel>, #tpu.dimension_semantics<parallel>], iteration_bounds = array<i64: 2, 1>, scalar_prefetch = 0 : i64, scratch_operands = 0 : i64, tpu.core_type = #tpu.core_type<tc>, window_params = [{transform_indices = @transform_0, window_bounds = array<i64: 1, 1, 24, 128>}, {pipeline_mode = #tpu.pipeline_mode<synchronous>, transform_indices = @transform_1, window_bounds = array<i64: 384, 128>}, {pipeline_mode = #tpu.pipeline_mode<synchronous>, transform_indices = @transform_2, window_bounds = array<i64: 1, 128>}, {pipeline_mode = #tpu.pipeline_mode<synchronous>, transform_indices = @transform_3, window_bounds = array<i64: 384, 128>}, {pipeline_mode = #tpu.pipeline_mode<synchronous>, transform_indices = @transform_4, window_bounds = array<i64: 1, 128>}, {pipeline_mode = #tpu.pipeline_mode<synchronous>, transform_indices = @transform_5, window_bounds = array<i64: 128, 128>}, {pipeline_mode = #tpu.pipeline_mode<synchronous>, transform_indices = @transform_6, window_bounds = array<i64: 1, 128>}, {transform_indices = @transform_7, window_bounds = array<i64: 1, 16, 128>}]} {
    %c0 = arith.constant 0 : index
    %c0_0 = arith.constant 0 : index
    %c0_1 = arith.constant 0 : index
    %c0_2 = arith.constant 0 : index
    %0 = vector.load %arg2[%c0, %c0_0, %c0_1, %c0_2] : memref<1x1x24x128xbf16, #tpu.memory_space<vmem>>, vector<1x1x24x128xbf16>
    %1 = vector.shape_cast %0 : vector<1x1x24x128xbf16> to vector<24x128xbf16>
    %2 = vector.extract_strided_slice %1 {offsets = [0, 0], sizes = [20, 128], strides = [1, 1]} : vector<24x128xbf16> to vector<20x128xbf16>
    %3 = vector.extract_strided_slice %1 {offsets = [2, 0], sizes = [20, 128], strides = [1, 1]} : vector<24x128xbf16> to vector<20x128xbf16>
    %4 = vector.extract_strided_slice %1 {offsets = [4, 0], sizes = [20, 128], strides = [1, 1]} : vector<24x128xbf16> to vector<20x128xbf16>
    %5 = tpu.concatenate %2, %3, %4 in 1 : vector<20x128xbf16>, vector<20x128xbf16>, vector<20x128xbf16> -> vector<20x384xbf16>
    %c0_3 = arith.constant 0 : index
    %c0_4 = arith.constant 0 : index
    %6 = vector.load %arg3[%c0_3, %c0_4] : memref<384x128xbf16, #tpu.memory_space<vmem>>, vector<384x128xbf16>
    %cst = arith.constant dense<0.000000e+00> : vector<20x128xf32>
    %7 = tpu.matmul %5, %6, %cst {dimension_numbers = #tpu.dot_dimension_numbers<[1], [0], [0], [1], [0, 0, 1, 1], [], []>} : vector<20x384xbf16>, vector<384x128xbf16>, vector<20x128xf32> -> vector<20x128xf32>
    %c0_5 = arith.constant 0 : index
    %c0_6 = arith.constant 0 : index
    %8 = vector.load %arg4[%c0_5, %c0_6] : memref<1x128xf32, #tpu.memory_space<vmem>>, vector<1x128xf32>
    %9 = vector.broadcast %8 : vector<1x128xf32> to vector<20x128xf32>
    %10 = arith.addf %7, %9 : vector<20x128xf32>
    %cst_7 = arith.constant 0.000000e+00 : f32
    %11 = vector.broadcast %cst_7 : f32 to vector<20x128xf32>
    %12 = arith.maximumf %10, %11 : vector<20x128xf32>
    %13 = tpu.iota {dimensions = array<i32: 0>} : vector<20x128xi32>
    %c16_i32 = arith.constant 16 : i32
    %14 = arith.muli %arg1, %c16_i32 : i32
    %c2_i32 = arith.constant 2 : i32
    %15 = arith.subi %14, %c2_i32 : i32
    %16 = vector.broadcast %15 : i32 to vector<20x128xi32>
    %17 = arith.addi %13, %16 : vector<20x128xi32>
    %c0_i32 = arith.constant 0 : i32
    %18 = vector.broadcast %c0_i32 : i32 to vector<20x128xi32>
    %19 = arith.cmpi sge, %17, %18 : vector<20x128xi32>
    %c16_i32_8 = arith.constant 16 : i32
    %20 = vector.broadcast %c16_i32_8 : i32 to vector<20x128xi32>
    %21 = arith.cmpi slt, %17, %20 : vector<20x128xi32>
    %22 = arith.andi %19, %21 : vector<20x128xi1>
    %cst_9 = arith.constant 0.000000e+00 : f32
    %23 = vector.broadcast %cst_9 : f32 to vector<20x128xf32>
    %24 = arith.select %22, %12, %23 : vector<20x128xi1>, vector<20x128xf32>
    %25 = vector.extract_strided_slice %1 {offsets = [4, 0], sizes = [16, 128], strides = [1, 1]} : vector<24x128xbf16> to vector<16x128xbf16>
    %c0_10 = arith.constant 0 : index
    %c0_11 = arith.constant 0 : index
    %26 = vector.load %arg7[%c0_10, %c0_11] : memref<128x128xbf16, #tpu.memory_space<vmem>>, vector<128x128xbf16>
    %cst_12 = arith.constant dense<0.000000e+00> : vector<16x128xf32>
    %27 = tpu.matmul %25, %26, %cst_12 {dimension_numbers = #tpu.dot_dimension_numbers<[1], [0], [0], [1], [0, 0, 1, 1], [], []>} : vector<16x128xbf16>, vector<128x128xbf16>, vector<16x128xf32> -> vector<16x128xf32>
    %c0_13 = arith.constant 0 : index
    %c0_14 = arith.constant 0 : index
    %28 = vector.load %arg8[%c0_13, %c0_14] : memref<1x128xf32, #tpu.memory_space<vmem>>, vector<1x128xf32>
    %29 = vector.broadcast %28 : vector<1x128xf32> to vector<16x128xf32>
    %30 = arith.addf %27, %29 : vector<16x128xf32>
    %31 = arith.truncf %24 : vector<20x128xf32> to vector<20x128xbf16>
    %32 = vector.extract_strided_slice %31 {offsets = [0, 0], sizes = [16, 128], strides = [1, 1]} : vector<20x128xbf16> to vector<16x128xbf16>
    %33 = vector.extract_strided_slice %31 {offsets = [2, 0], sizes = [16, 128], strides = [1, 1]} : vector<20x128xbf16> to vector<16x128xbf16>
    %34 = vector.extract_strided_slice %31 {offsets = [4, 0], sizes = [16, 128], strides = [1, 1]} : vector<20x128xbf16> to vector<16x128xbf16>
    %35 = tpu.concatenate %32, %33, %34 in 1 : vector<16x128xbf16>, vector<16x128xbf16>, vector<16x128xbf16> -> vector<16x384xbf16>
    %c0_15 = arith.constant 0 : index
    %c0_16 = arith.constant 0 : index
    %36 = vector.load %arg5[%c0_15, %c0_16] : memref<384x128xbf16, #tpu.memory_space<vmem>>, vector<384x128xbf16>
    %cst_17 = arith.constant dense<0.000000e+00> : vector<16x128xf32>
    %37 = tpu.matmul %35, %36, %cst_17 {dimension_numbers = #tpu.dot_dimension_numbers<[1], [0], [0], [1], [0, 0, 1, 1], [], []>} : vector<16x384xbf16>, vector<384x128xbf16>, vector<16x128xf32> -> vector<16x128xf32>
    %c0_18 = arith.constant 0 : index
    %c0_19 = arith.constant 0 : index
    %38 = vector.load %arg6[%c0_18, %c0_19] : memref<1x128xf32, #tpu.memory_space<vmem>>, vector<1x128xf32>
    %39 = vector.broadcast %38 : vector<1x128xf32> to vector<16x128xf32>
    %40 = arith.addf %37, %39 : vector<16x128xf32>
    %cst_20 = arith.constant 0.000000e+00 : f32
    %41 = vector.broadcast %cst_20 : f32 to vector<16x128xf32>
    %42 = arith.maximumf %40, %41 : vector<16x128xf32>
    %43 = arith.addf %42, %30 : vector<16x128xf32>
    %cst_21 = arith.constant 0.000000e+00 : f32
    %44 = vector.broadcast %cst_21 : f32 to vector<16x128xf32>
    %45 = arith.maximumf %43, %44 : vector<16x128xf32>
    %46 = arith.truncf %45 : vector<16x128xf32> to vector<16x128xbf16>
    %c0_22 = arith.constant 0 : index
    %c0_23 = arith.constant 0 : index
    %c0_24 = arith.constant 0 : index
    %47 = vector.load %arg9[%c0_22, %c0_23, %c0_24] : memref<1x16x128xbf16, #tpu.memory_space<vmem>>, vector<1x16x128xbf16>
    %48 = vector.shape_cast %47 : vector<1x16x128xbf16> to vector<16x128xbf16>
    %49 = vector.shape_cast %46 : vector<16x128xbf16> to vector<1x16x128xbf16>
    tpu.vector_store %arg9[%c0_22, %c0_23, %c0_24], %49 {strides = array<i32>} : memref<1x16x128xbf16, #tpu.memory_space<vmem>>, vector<1x16x128xbf16>,
    return
  }
  func.func @transform_0(%arg0: i32, %arg1: i32) -> (i32, i32, i32, i32) {
    %c0_i32 = arith.constant 0 : i32
    %c0_i32_0 = arith.constant 0 : i32
    %c0_i32_1 = arith.constant 0 : i32
    return %arg0, %arg1, %c0_i32, %c0_i32_0 : i32, i32, i32, i32
  }
  func.func @transform_1(%arg0: i32, %arg1: i32) -> (i32, i32) {
    %c0_i32 = arith.constant 0 : i32
    %c0_i32_0 = arith.constant 0 : i32
    %c0_i32_1 = arith.constant 0 : i32
    return %c0_i32, %c0_i32_0 : i32, i32
  }
  func.func @transform_2(%arg0: i32, %arg1: i32) -> (i32, i32) {
    %c0_i32 = arith.constant 0 : i32
    %c0_i32_0 = arith.constant 0 : i32
    %c0_i32_1 = arith.constant 0 : i32
    return %c0_i32, %c0_i32_0 : i32, i32
  }
  func.func @transform_3(%arg0: i32, %arg1: i32) -> (i32, i32) {
    %c0_i32 = arith.constant 0 : i32
    %c0_i32_0 = arith.constant 0 : i32
    %c0_i32_1 = arith.constant 0 : i32
    return %c0_i32, %c0_i32_0 : i32, i32
  }
  func.func @transform_4(%arg0: i32, %arg1: i32) -> (i32, i32) {
    %c0_i32 = arith.constant 0 : i32
    %c0_i32_0 = arith.constant 0 : i32
    %c0_i32_1 = arith.constant 0 : i32
    return %c0_i32, %c0_i32_0 : i32, i32
  }
  func.func @transform_5(%arg0: i32, %arg1: i32) -> (i32, i32) {
    %c0_i32 = arith.constant 0 : i32
    %c0_i32_0 = arith.constant 0 : i32
    %c0_i32_1 = arith.constant 0 : i32
    return %c0_i32, %c0_i32_0 : i32, i32
  }
  func.func @transform_6(%arg0: i32, %arg1: i32) -> (i32, i32) {
    %c0_i32 = arith.constant 0 : i32
    %c0_i32_0 = arith.constant 0 : i32
    %c0_i32_1 = arith.constant 0 : i32
    return %c0_i32, %c0_i32_0 : i32, i32
  }
  func.func @transform_7(%arg0: i32, %arg1: i32) -> (i32, i32, i32) {
    %c0_i32 = arith.constant 0 : i32
    %c0_i32_0 = arith.constant 0 : i32
    return %arg0, %arg1, %c0_i32 : i32, i32, i32
  }
}

module attributes {stable_mosaic.version = 11 : i64} {
  func.func @temporal_block_kernel(%arg0: i32, %arg1: i32, %arg2: memref<1x1x24x128xbf16, #tpu.memory_space<vmem>>, %arg3: memref<384x128xbf16, #tpu.memory_space<vmem>>, %arg4: memref<1x128xf32, #tpu.memory_space<vmem>>, %arg5: memref<384x128xbf16, #tpu.memory_space<vmem>>, %arg6: memref<1x128xf32, #tpu.memory_space<vmem>>, %arg7: memref<128x128xbf16, #tpu.memory_space<vmem>>, %arg8: memref<1x128xf32, #tpu.memory_space<vmem>>, %arg9: memref<1x16x128xbf16, #tpu.memory_space<vmem>>) attributes {dimension_semantics = [#tpu.dimension_semantics<parallel>, #tpu.dimension_semantics<parallel>], iteration_bounds = array<i64: 2, 1>, scalar_prefetch = 0 : i64, scratch_operands = 0 : i64, tpu.core_type = #tpu.core_type<tc>, window_params = [{transform_indices = @transform_0, window_bounds = array<i64: 1, 1, 24, 128>}, {pipeline_mode = #tpu.pipeline_mode<synchronous>, transform_indices = @transform_1, window_bounds = array<i64: 384, 128>}, {pipeline_mode = #tpu.pipeline_mode<synchronous>, transform_indices = @transform_2, window_bounds = array<i64: 1, 128>}, {pipeline_mode = #tpu.pipeline_mode<synchronous>, transform_indices = @transform_3, window_bounds = array<i64: 384, 128>}, {pipeline_mode = #tpu.pipeline_mode<synchronous>, transform_indices = @transform_4, window_bounds = array<i64: 1, 128>}, {pipeline_mode = #tpu.pipeline_mode<synchronous>, transform_indices = @transform_5, window_bounds = array<i64: 128, 128>}, {pipeline_mode = #tpu.pipeline_mode<synchronous>, transform_indices = @transform_6, window_bounds = array<i64: 1, 128>}, {transform_indices = @transform_7, window_bounds = array<i64: 1, 16, 128>}]} {
    %c0 = arith.constant 0 : index
    %c0_0 = arith.constant 0 : index
    %c0_1 = arith.constant 0 : index
    %c0_2 = arith.constant 0 : index
    %0 = vector.load %arg2[%c0, %c0_0, %c0_1, %c0_2] : memref<1x1x24x128xbf16, #tpu.memory_space<vmem>>, vector<1x1x24x128xbf16>
    %1 = vector.shape_cast %0 : vector<1x1x24x128xbf16> to vector<24x128xbf16>
    %2 = vector.extract_strided_slice %1 {offsets = [0, 0], sizes = [20, 128], strides = [1, 1]} : vector<24x128xbf16> to vector<20x128xbf16>
    %3 = vector.extract_strided_slice %1 {offsets = [2, 0], sizes = [20, 128], strides = [1, 1]} : vector<24x128xbf16> to vector<20x128xbf16>
    %4 = vector.extract_strided_slice %1 {offsets = [4, 0], sizes = [20, 128], strides = [1, 1]} : vector<24x128xbf16> to vector<20x128xbf16>
    %5 = tpu.concatenate %2, %3, %4 in 1 : vector<20x128xbf16>, vector<20x128xbf16>, vector<20x128xbf16> -> vector<20x384xbf16>
    %c0_3 = arith.constant 0 : index
    %c0_4 = arith.constant 0 : index
    %6 = vector.load %arg3[%c0_3, %c0_4] : memref<384x128xbf16, #tpu.memory_space<vmem>>, vector<384x128xbf16>
    %cst = arith.constant dense<0.000000e+00> : vector<20x128xf32>
    %7 = tpu.matmul %5, %6, %cst {dimension_numbers = #tpu.dot_dimension_numbers<[1], [0], [0], [1], [0, 0, 1, 1], [], []>} : vector<20x384xbf16>, vector<384x128xbf16>, vector<20x128xf32> -> vector<20x128xf32>
    %c0_5 = arith.constant 0 : index
    %c0_6 = arith.constant 0 : index
    %8 = vector.load %arg4[%c0_5, %c0_6] : memref<1x128xf32, #tpu.memory_space<vmem>>, vector<1x128xf32>
    %9 = vector.broadcast %8 : vector<1x128xf32> to vector<20x128xf32>
    %10 = arith.addf %7, %9 : vector<20x128xf32>
    %cst_7 = arith.constant 0.000000e+00 : f32
    %11 = vector.broadcast %cst_7 : f32 to vector<20x128xf32>
    %12 = arith.maximumf %10, %11 : vector<20x128xf32>
    %13 = tpu.iota {dimensions = array<i32: 0>} : vector<20x128xi32>
    %c16_i32 = arith.constant 16 : i32
    %14 = arith.muli %arg1, %c16_i32 : i32
    %c2_i32 = arith.constant 2 : i32
    %15 = arith.subi %14, %c2_i32 : i32
    %16 = vector.broadcast %15 : i32 to vector<20x128xi32>
    %17 = arith.addi %13, %16 : vector<20x128xi32>
    %c0_i32 = arith.constant 0 : i32
    %18 = vector.broadcast %c0_i32 : i32 to vector<20x128xi32>
    %19 = arith.cmpi sge, %17, %18 : vector<20x128xi32>
    %c16_i32_8 = arith.constant 16 : i32
    %20 = vector.broadcast %c16_i32_8 : i32 to vector<20x128xi32>
    %21 = arith.cmpi slt, %17, %20 : vector<20x128xi32>
    %22 = arith.andi %19, %21 : vector<20x128xi1>
    %cst_9 = arith.constant 0.000000e+00 : f32
    %23 = vector.broadcast %cst_9 : f32 to vector<20x128xf32>
    %24 = arith.select %22, %12, %23 : vector<20x128xi1>, vector<20x128xf32>
    %25 = vector.extract_strided_slice %1 {offsets = [4, 0], sizes = [16, 128], strides = [1, 1]} : vector<24x128xbf16> to vector<16x128xbf16>
    %c0_10 = arith.constant 0 : index
    %c0_11 = arith.constant 0 : index
    %26 = vector.load %arg7[%c0_10, %c0_11] : memref<128x128xbf16, #tpu.memory_space<vmem>>, vector<128x128xbf16>
    %cst_12 = arith.constant dense<0.000000e+00> : vector<16x128xf32>
    %27 = tpu.matmul %25, %26, %cst_12 {dimension_numbers = #tpu.dot_dimension_numbers<[1], [0], [0], [1], [0, 0, 1, 1], [], []>} : vector<16x128xbf16>, vector<128x128xbf16>, vector<16x128xf32> -> vector<16x128xf32>
    %c0_13 = arith.constant 0 : index
    %c0_14 = arith.constant 0 : index
    %28 = vector.load %arg8[%c0_13, %c0_14] : memref<1x128xf32, #tpu.memory_space<vmem>>, vector<1x128xf32>
    %29 = vector.broadcast %28 : vector<1x128xf32> to vector<16x128xf32>
    %30 = arith.addf %27, %29 : vector<16x128xf32>
    %31 = arith.truncf %24 : vector<20x128xf32> to vector<20x128xbf16>
    %32 = vector.extract_strided_slice %31 {offsets = [0, 0], sizes = [16, 128], strides = [1, 1]} : vector<20x128xbf16> to vector<16x128xbf16>
    %33 = vector.extract_strided_slice %31 {offsets = [2, 0], sizes = [16, 128], strides = [1, 1]} : vector<20x128xbf16> to vector<16x128xbf16>
    %34 = vector.extract_strided_slice %31 {offsets = [4, 0], sizes = [16, 128], strides = [1, 1]} : vector<20x128xbf16> to vector<16x128xbf16>
    %35 = tpu.concatenate %32, %33, %34 in 1 : vector<16x128xbf16>, vector<16x128xbf16>, vector<16x128xbf16> -> vector<16x384xbf16>
    %c0_15 = arith.constant 0 : index
    %c0_16 = arith.constant 0 : index
    %36 = vector.load %arg5[%c0_15, %c0_16] : memref<384x128xbf16, #tpu.memory_space<vmem>>, vector<384x128xbf16>
    %cst_17 = arith.constant dense<0.000000e+00> : vector<16x128xf32>
    %37 = tpu.matmul %35, %36, %cst_17 {dimension_numbers = #tpu.dot_dimension_numbers<[1], [0], [0], [1], [0, 0, 1, 1], [], []>} : vector<16x384xbf16>, vector<384x128xbf16>, vector<16x128xf32> -> vector<16x128xf32>
    %c0_18 = arith.constant 0 : index
    %c0_19 = arith.constant 0 : index
    %38 = vector.load %arg6[%c0_18, %c0_19] : memref<1x128xf32, #tpu.memory_space<vmem>>, vector<1x128xf32>
    %39 = vector.broadcast %38 : vector<1x128xf32> to vector<16x128xf32>
    %40 = arith.addf %37, %39 : vector<16x128xf32>
    %cst_20 = arith.constant 0.000000e+00 : f32
    %41 = vector.broadcast %cst_20 : f32 to vector<16x128xf32>
    %42 = arith.maximumf %40, %41 : vector<16x128xf32>
    %43 = arith.addf %42, %30 : vector<16x128xf32>
    %cst_21 = arith.constant 0.000000e+00 : f32
    %44 = vector.broadcast %cst_21 : f32 to vector<16x128xf32>
    %45 = arith.maximumf %43, %44 : vector<16x128xf32>
    %46 = arith.truncf %45 : vector<16x128xf32> to vector<16x128xbf16>
    %c0_22 = arith.constant 0 : index
    %c0_23 = arith.constant 0 : index
    %c0_24 = arith.constant 0 : index
    %47 = vector.load %arg9[%c0_22, %c0_23, %c0_24] : memref<1x16x128xbf16, #tpu.memory_space<vmem>>, vector<1x16x128xbf16>
    %48 = vector.shape_cast %47 : vector<1x16x128xbf16> to vector<16x128xbf16>
    %49 = vector.shape_cast %46 : vector<16x128xbf16> to vector<1x16x128xbf16>
    tpu.vector_store %arg9[%c0_22, %c0_23, %c0_24], %49 {strides = array<i32>} : memref<1x16x128xbf16, #tpu.memory_space<vmem>>, vector<1x16x128xbf16>,
    return
  }
  func.func @transform_0(%arg0: i32, %arg1: i32) -> (i32, i32, i32, i32) {
    %c0_i32 = arith.constant 0 : i32
    %c0_i32_0 = arith.constant 0 : i32
    %c0_i32_1 = arith.constant 0 : i32
    return %arg0, %arg1, %c0_i32, %c0_i32_0 : i32, i32, i32, i32
  }
  func.func @transform_1(%arg0: i32, %arg1: i32) -> (i32, i32) {
    %c0_i32 = arith.constant 0 : i32
    %c0_i32_0 = arith.constant 0 : i32
    %c0_i32_1 = arith.constant 0 : i32
    return %c0_i32, %c0_i32_0 : i32, i32
  }
  func.func @transform_2(%arg0: i32, %arg1: i32) -> (i32, i32) {
    %c0_i32 = arith.constant 0 : i32
    %c0_i32_0 = arith.constant 0 : i32
    %c0_i32_1 = arith.constant 0 : i32
    return %c0_i32, %c0_i32_0 : i32, i32
  }
  func.func @transform_3(%arg0: i32, %arg1: i32) -> (i32, i32) {
    %c0_i32 = arith.constant 0 : i32
    %c0_i32_0 = arith.constant 0 : i32
    %c0_i32_1 = arith.constant 0 : i32
    return %c0_i32, %c0_i32_0 : i32, i32
  }
  func.func @transform_4(%arg0: i32, %arg1: i32) -> (i32, i32) {
    %c0_i32 = arith.constant 0 : i32
    %c0_i32_0 = arith.constant 0 : i32
    %c0_i32_1 = arith.constant 0 : i32
    return %c0_i32, %c0_i32_0 : i32, i32
  }
  func.func @transform_5(%arg0: i32, %arg1: i32) -> (i32, i32) {
    %c0_i32 = arith.constant 0 : i32
    %c0_i32_0 = arith.constant 0 : i32
    %c0_i32_1 = arith.constant 0 : i32
    return %c0_i32, %c0_i32_0 : i32, i32
  }
  func.func @transform_6(%arg0: i32, %arg1: i32) -> (i32, i32) {
    %c0_i32 = arith.constant 0 : i32
    %c0_i32_0 = arith.constant 0 : i32
    %c0_i32_1 = arith.constant 0 : i32
    return %c0_i32, %c0_i32_0 : i32, i32
  }
  func.func @transform_7(%arg0: i32, %arg1: i32) -> (i32, i32, i32) {
    %c0_i32 = arith.constant 0 : i32
    %c0_i32_0 = arith.constant 0 : i32
    return %arg0, %arg1, %c0_i32 : i32, i32, i32
  }
}

</mosaic_0001>

<llo_original>
// kernel: tpu_custom_call.1
$region0: #{tpu_custom_call.1}
  #allocation0 [shape = 'u32[]', space=smem, size = 0x4, offset = 0x4, fixed_abs, tag = 'smem constant byte address 0x4 - core index']
  #allocation1 [shape = 'u32[144,128]{1,0:T(1,128)}', space=vmem, size = 0x12000, scoped, tag = 'internal scratch']
  %s0 = inlined_call_operand.hbm [shape: bf16[2,1,24,128], index: 0, kind: input, shape index: {}]
  %s1 = inlined_call_operand.hbm [shape: bf16[384,128], index: 1, kind: input, shape index: {}]
  %s2 = inlined_call_operand.vmem [shape: f32[1,128], index: 2, kind: input, shape index: {}]
  %s3 = inlined_call_operand.hbm [shape: bf16[384,128], index: 3, kind: input, shape index: {}]
  %s4 = inlined_call_operand.vmem [shape: f32[1,128], index: 4, kind: input, shape index: {}]
  %s5 = inlined_call_operand.hbm [shape: bf16[128,128], index: 5, kind: input, shape index: {}]
  %s6 = inlined_call_operand.vmem [shape: f32[1,128], index: 6, kind: input, shape index: {}]
  %s7 = inlined_call_operand.hbm [shape: bf16[2,16,128], index: 7, kind: output, shape index: {}]
  %s8 = sld [smem:[#allocation0]]
  $region77: #{tpu_custom_call.1} parent=0
    _
  %s10 = ssub.s32 1, %s8
  %s11 = scalar_select 0, %s10, %s8
  $region1: #{tpu_custom_call.1} parent=0
    #allocation2 [shape = 'u8[12288]{0}', space=vmem, size = 0x3000, scoped, tag = 'input window, operand 0']
    #allocation3 [shape = 's32[2]{0}', space=sflag, size = 0x8, scoped, tag = 'scoped memory for tpu_custom_call.1']
    #allocation4 [shape = 's32[2]{0}', space=sflag, size = 0x8, scoped, tag = 'scoped memory for tpu_custom_call.1']
    #allocation5 [shape = 'u8[98304]{0}', space=vmem, size = 0x18000, scoped, tag = 'input window, operand 1, single buffered']
    #allocation6 [shape = 's32[1]{0}', space=sflag, size = 0x4, scoped, tag = 'scoped memory for tpu_custom_call.1']
    #allocation7 [shape = 'u8[98304]{0}', space=vmem, size = 0x18000, scoped, tag = 'input window, operand 3, single buffered']
    #allocation8 [shape = 'u8[32768]{0}', space=vmem, size = 0x8000, scoped, tag = 'input window, operand 5, single buffered']
    #allocation9 [shape = 's32[1]{0}', space=sflag, size = 0x4, scoped, tag = 'scoped memory for tpu_custom_call.1']
    #allocation10 [shape = 'u8[8192]{0}', space=vmem, size = 0x2000, scoped, tag = 'output window, operand 0']
    %12 = vsyncpa [#allocation3], 0
    %s13 = scalar_lea.sflag [#allocation3], 1
    %14 = vsyncpa %s13, 0
    %15 = vsyncpa [#allocation6], 0
    %16 = vsyncpa [#allocation9], 0
    %17 = vsyncpa [#allocation4], 0
    %s18 = scalar_lea.sflag [#allocation4], 1
    %19 = vsyncpa %s18, 0
    loop: start=0, step=1, limit=4
    $region2: #{tpu_custom_call.1} parent=1 // loop_pre_header
      _
    $region3: #{tpu_custom_call.1} parent=1 // loop_header
      %s21 = sphi 0, %s25
      %p22 = scmp.ge.s32.totalorder %s21, 4
      %s28 = sphi 0, %s40
      %s29 = sphi 0, %s36
      %s30 = sphi 0, %s28
      %s31 = sphi 0, %s29
      %s32 = sphi 0, %s30
      %s33 = sphi 0, %s31
      %s45 = sphi 0, %s47
      %s48 = sphi 0, %s45
      %s49 = sphi 0, %s48
      %s65 = sphi 0, %s49
      %s69 = sphi 0, %s69
      %s71 = sphi 0, %s69
      %s72 = sphi 0, %s71
      %s86 = sphi 0, %s72
      %s90 = sphi 0, %s90
      %s92 = sphi 0, %s90
      %s93 = sphi 0, %s92
      %s107 = sphi 0, %s93
      %s111 = sphi 0, %s111
      %s113 = sphi 0, %s111
      %s114 = sphi 0, %s113
      %s128 = sphi 0, %s114
      %s132 = sphi 0, %s132
      %s134 = sphi 0, %s132
      %s135 = sphi 0, %s134
      %s149 = sphi 0, %s135
      %s153 = sphi 0, %s153
      %s155 = sphi 0, %s153
      %s156 = sphi 0, %s155
      %s170 = sphi 0, %s156
      %s174 = sphi 0, %s174
      %s176 = sphi 0, %s174
      %s177 = sphi 0, %s176
      %s191 = sphi 0, %s177
      %s199 = sphi 0, %s201
      %s202 = sphi 0, %s199
      %s203 = sphi 0, %s202
      %s219 = sphi 0, %s203
    $region4: #{tpu_custom_call.1} parent=1 // loop_header_branch
      %24 = sbr.rel (%p22) target = $region8
    $region5: #{tpu_custom_call.1} parent=1 // loop_body
      %s26 = ssub.s32 %s21, 1
      %s27 = ssub.s32 %s21, 2
      %s34 = sadd.s32 1, %s29
      %p35 = scmp.ge.s32.totalorder %s34, 1
      %s36 = scalar_select %p35, 0, %s34
      %s37 = sadd.s32 1, %s28
      %s38 = scalar_select %p35, %s37, %s28
      %p39 = scmp.ge.s32.totalorder %s38, 2
      %s40 = scalar_select %p39, 0, %s38
      %s41 = ssub.s32 %s28, %s40
      %s42 = ssub.s32 %s29, %s36
      %s43 = sor.u32 %s41, %s42
      %p44 = scmp.eq.s32.totalorder %s43, 0
      %s46 = sadd.s32 %s45, 1
      %s47 = scalar_select %p44, %s45, %s46
      %p50 = pneg %p44
      %p51 = scmp.eq.s32.totalorder %s21, 1
      %p52 = por %p50, %p51
      %p53 = scmp.ne.s32.totalorder %s45, %s48
      %p54 = scmp.eq.s32.totalorder %s21, 0
      %p55 = por %p53, %p54
      %p56 = scmp.ne.s32.totalorder %s45, %s48
      %p57 = scmp.eq.s32.totalorder %s26, 1
      %p58 = por %p56, %p57
      %p59 = scmp.ne.s32.totalorder %s48, %s49
      %p60 = scmp.eq.s32.totalorder %s26, 0
      %p61 = por %p59, %p60
      %p62 = scmp.ne.s32.totalorder %s48, %s49
      %p63 = scmp.eq.s32.totalorder %s27, 1
      %p64 = por %p62, %p63
      %p66 = scmp.ne.s32.totalorder %s49, %s65
      %p67 = scmp.eq.s32.totalorder %s27, 0
      %p68 = por %p66, %p67
      %s70 = sadd.s32 %s69, 1
      %p73 = scmp.eq.s32.totalorder %s21, 1
      %p74 = scmp.ne.s32.totalorder %s69, %s71
      %p75 = scmp.eq.s32.totalorder %s21, 0
      %p76 = por %p74, %p75
      %p77 = scmp.ne.s32.totalorder %s69, %s71
      %p78 = scmp.eq.s32.totalorder %s26, 1
      %p79 = por %p77, %p78
      %p80 = scmp.ne.s32.totalorder %s71, %s72
      %p81 = scmp.eq.s32.totalorder %s26, 0
      %p82 = por %p80, %p81
      %p83 = scmp.ne.s32.totalorder %s71, %s72
      %p84 = scmp.eq.s32.totalorder %s27, 1
      %p85 = por %p83, %p84
      %p87 = scmp.ne.s32.totalorder %s72, %s86
      %p88 = scmp.eq.s32.totalorder %s27, 0
      %p89 = por %p87, %p88
      %s91 = sadd.s32 %s90, 1
      %p94 = scmp.eq.s32.totalorder %s21, 1
      %p95 = scmp.ne.s32.totalorder %s90, %s92
      %p96 = scmp.eq.s32.totalorder %s21, 0
      %p97 = por %p95, %p96
      %p98 = scmp.ne.s32.totalorder %s90, %s92
      %p99 = scmp.eq.s32.totalorder %s26, 1
      %p100 = por %p98, %p99
      %p101 = scmp.ne.s32.totalorder %s92, %s93
      %p102 = scmp.eq.s32.totalorder %s26, 0
      %p103 = por %p101, %p102
      %p104 = scmp.ne.s32.totalorder %s92, %s93
      %p105 = scmp.eq.s32.totalorder %s27, 1
      %p106 = por %p104, %p105
      %p108 = scmp.ne.s32.totalorder %s93, %s107
      %p109 = scmp.eq.s32.totalorder %s27, 0
      %p110 = por %p108, %p109
      %s112 = sadd.s32 %s111, 1
      %p115 = scmp.eq.s32.totalorder %s21, 1
      %p116 = scmp.ne.s32.totalorder %s111, %s113
      %p117 = scmp.eq.s32.totalorder %s21, 0
      %p118 = por %p116, %p117
      %p119 = scmp.ne.s32.totalorder %s111, %s113
      %p120 = scmp.eq.s32.totalorder %s26, 1
      %p121 = por %p119, %p120
      %p122 = scmp.ne.s32.totalorder %s113, %s114
      %p123 = scmp.eq.s32.totalorder %s26, 0
      %p124 = por %p122, %p123
      %p125 = scmp.ne.s32.totalorder %s113, %s114
      %p126 = scmp.eq.s32.totalorder %s27, 1
      %p127 = por %p125, %p126
      %p129 = scmp.ne.s32.totalorder %s114, %s128
      %p130 = scmp.eq.s32.totalorder %s27, 0
      %p131 = por %p129, %p130
      %s133 = sadd.s32 %s132, 1
      %p136 = scmp.eq.s32.totalorder %s21, 1
      %p137 = scmp.ne.s32.totalorder %s132, %s134
      %p138 = scmp.eq.s32.totalorder %s21, 0
      %p139 = por %p137, %p138
      %p140 = scmp.ne.s32.totalorder %s132, %s134
      %p141 = scmp.eq.s32.totalorder %s26, 1
      %p142 = por %p140, %p141
      %p143 = scmp.ne.s32.totalorder %s134, %s135
      %p144 = scmp.eq.s32.totalorder %s26, 0
      %p145 = por %p143, %p144
      %p146 = scmp.ne.s32.totalorder %s134, %s135
      %p147 = scmp.eq.s32.totalorder %s27, 1
      %p148 = por %p146, %p147
      %p150 = scmp.ne.s32.totalorder %s135, %s149
      %p151 = scmp.eq.s32.totalorder %s27, 0
      %p152 = por %p150, %p151
      %s154 = sadd.s32 %s153, 1
      %p157 = scmp.eq.s32.totalorder %s21, 1
      %p158 = scmp.ne.s32.totalorder %s153, %s155
      %p159 = scmp.eq.s32.totalorder %s21, 0
      %p160 = por %p158, %p159
      %p161 = scmp.ne.s32.totalorder %s153, %s155
      %p162 = scmp.eq.s32.totalorder %s26, 1
      %p163 = por %p161, %p162
      %p164 = scmp.ne.s32.totalorder %s155, %s156
      %p165 = scmp.eq.s32.totalorder %s26, 0
      %p166 = por %p164, %p165
      %p167 = scmp.ne.s32.totalorder %s155, %s156
      %p168 = scmp.eq.s32.totalorder %s27, 1
      %p169 = por %p167, %p168
      %p171 = scmp.ne.s32.totalorder %s156, %s170
      %p172 = scmp.eq.s32.totalorder %s27, 0
      %p173 = por %p171, %p172
      %s175 = sadd.s32 %s174, 1
      %p178 = scmp.eq.s32.totalorder %s21, 1
      %p179 = scmp.ne.s32.totalorder %s174, %s176
      %p180 = scmp.eq.s32.totalorder %s21, 0
      %p181 = por %p179, %p180
      %p182 = scmp.ne.s32.totalorder %s174, %s176
      %p183 = scmp.eq.s32.totalorder %s26, 1
      %p184 = por %p182, %p183
      %p185 = scmp.ne.s32.totalorder %s176, %s177
      %p186 = scmp.eq.s32.totalorder %s26, 0
      %p187 = por %p185, %p186
      %p188 = scmp.ne.s32.totalorder %s176, %s177
      %p189 = scmp.eq.s32.totalorder %s27, 1
      %p190 = por %p188, %p189
      %p192 = scmp.ne.s32.totalorder %s177, %s191
      %p193 = scmp.eq.s32.totalorder %s27, 0
      %p194 = por %p192, %p193
      %s195 = ssub.s32 %s28, %s40
      %s196 = ssub.s32 %s29, %s36
      %s197 = sor.u32 %s195, %s196
      %p198 = scmp.eq.s32.totalorder %s197, 0
      %s200 = sadd.s32 %s199, 1
      %s201 = scalar_select %p198, %s199, %s200
      %p204 = pneg %p198
      %p205 = scmp.eq.s32.totalorder %s21, 1
      %p206 = por %p204, %p205
      %p207 = scmp.ne.s32.totalorder %s199, %s202
      %p208 = scmp.eq.s32.totalorder %s21, 0
      %p209 = por %p207, %p208
      %p210 = scmp.ne.s32.totalorder %s199, %s202
      %p211 = scmp.eq.s32.totalorder %s26, 1
      %p212 = por %p210, %p211
      %p213 = scmp.ne.s32.totalorder %s202, %s203
      %p214 = scmp.eq.s32.totalorder %s26, 0
      %p215 = por %p213, %p214
      %p216 = scmp.ne.s32.totalorder %s202, %s203
      %p217 = scmp.eq.s32.totalorder %s27, 1
      %p218 = por %p216, %p217
      %p220 = scmp.ne.s32.totalorder %s203, %s219
      %p221 = scmp.eq.s32.totalorder %s27, 0
      %p222 = por %p220, %p221
      %p223 = scmp.le.s32.totalorder 1, %s21
      %p224 = scmp.lt.s32.totalorder %s21, 3
      %p225 = pnand %p223, %p224
      %p226 = pneg %p225
      // Predicated region
      $region9: #{tpu_custom_call.1} parent=5 // pred_check
        _
      $region10: #{tpu_custom_call.1} parent=5 // pred_check_branch
        %228 = sbr.rel (%p225) target = $region12
      $region11: #{tpu_custom_call.1} parent=5 // pred_region
        %s229 = ssub.s32 %s21, 1
        // Predicated region
        $region13: #{tpu_custom_call.1} parent=11 // pred_check
          %p230 = pneg %p82
        $region14: #{tpu_custom_call.1} parent=11 // pred_check_branch
          %232 = sbr.rel (%p230) target = $region16
        $region15: #{tpu_custom_call.1} parent=11 // pred_region
          %s234 = ssub.s32 3072, 3072
          %235 = vsyncadd [#allocation6], %s234
          %s236 = sshll.u32 [#allocation5], 4
          %s237 = int_to_ptr.vmem [resolvable:$true] %s236
          %242 = dma.hbm_to_vmem [thread:$0]  %s1, 3072, %s237, [#allocation6], 64, 64, 4
        $region16: #{tpu_custom_call.1} parent=11 // pred_fallthru
          _
        // Predicated region
        $region17: #{tpu_custom_call.1} parent=11 // pred_check
          %p243 = pneg %p103
        $region18: #{tpu_custom_call.1} parent=11 // pred_check_branch
          %245 = sbr.rel (%p243) target = $region20
        $region19: #{tpu_custom_call.1} parent=11 // pred_region
          _
        $region20: #{tpu_custom_call.1} parent=11 // pred_fallthru
          _
        // Predicated region
        $region21: #{tpu_custom_call.1} parent=11 // pred_check
          %p246 = pneg %p124
        $region22: #{tpu_custom_call.1} parent=11 // pred_check_branch
          %248 = sbr.rel (%p246) target = $region24
        $region23: #{tpu_custom_call.1} parent=11 // pred_region
          %s250 = ssub.s32 3072, 3072
          %251 = vsyncadd [#allocation6], %s250
          %s252 = sshll.u32 [#allocation7], 4
          %s253 = int_to_ptr.vmem [resolvable:$true] %s252
          %258 = dma.hbm_to_vmem [thread:$0]  %s3, 3072, %s253, [#allocation6], 64, 64, 4
        $region24: #{tpu_custom_call.1} parent=11 // pred_fallthru
          _
        // Predicated region
        $region25: #{tpu_custom_call.1} parent=11 // pred_check
          %p259 = pneg %p145
        $region26: #{tpu_custom_call.1} parent=11 // pred_check_branch
          %261 = sbr.rel (%p259) target = $region28
        $region27: #{tpu_custom_call.1} parent=11 // pred_region
          _
        $region28: #{tpu_custom_call.1} parent=11 // pred_fallthru
          _
        // Predicated region
        $region29: #{tpu_custom_call.1} parent=11 // pred_check
          %p262 = pneg %p166
        $region30: #{tpu_custom_call.1} parent=11 // pred_check_branch
          %264 = sbr.rel (%p262) target = $region32
        $region31: #{tpu_custom_call.1} parent=11 // pred_region
          %s266 = ssub.s32 1024, 1024
          %267 = vsyncadd [#allocation9], %s266
          %s268 = sshll.u32 [#allocation8], 4
          %s269 = int_to_ptr.vmem [resolvable:$true] %s268
          %274 = dma.hbm_to_vmem [thread:$0]  %s5, 1024, %s269, [#allocation9], 64, 64, 4
        $region32: #{tpu_custom_call.1} parent=11 // pred_fallthru
          _
        // Predicated region
        $region33: #{tpu_custom_call.1} parent=11 // pred_check
          %p275 = pneg %p187
        $region34: #{tpu_custom_call.1} parent=11 // pred_check_branch
          %277 = sbr.rel (%p275) target = $region36
        $region35: #{tpu_custom_call.1} parent=11 // pred_region
          _
        $region36: #{tpu_custom_call.1} parent=11 // pred_fallthru
          _
      $region12: #{tpu_custom_call.1} parent=5 // pred_fallthru
        _
      %p278 = scmp.lt.s32.totalorder %s21, 2
      // Predicated region
      $region37: #{tpu_custom_call.1} parent=5 // pred_check
        %p279 = pneg %p278
      $region38: #{tpu_custom_call.1} parent=5 // pred_check_branch
        %281 = sbr.rel (%p279) target = $region40
      $region39: #{tpu_custom_call.1} parent=5 // pred_region
        // Predicated region
        $region41: #{tpu_custom_call.1} parent=39 // pred_check
          %p282 = pneg %p55
        $region42: #{tpu_custom_call.1} parent=39 // pred_check_branch
          %284 = sbr.rel (%p282) target = $region44
        $region43: #{tpu_custom_call.1} parent=39 // pred_region
          %s285 = sand.u32 %s45, 1
          %s286 = scalar_lea.sflag [#allocation3], %s285
          %s287 = sand.u32 %s45, 1
          %s288 = smul.addr %s287, 12
          %s289 = scalar_lea.vmem [#allocation2], %s288
          %s291 = ssub.s32 192, 192
          %292 = vsyncadd %s286, %s291
          %s293 = smul.addr %s29, 3
          %s294 = smul.addr %s28, 3
          %s295 = sadd.s32 %s293, %s294
          %s296 = smul.addr %s295, 64
          %s297 = scalar_lea.hbm %s0, %s296
          %s298 = sshll.u32 %s289, 4
          %s299 = int_to_ptr.vmem [resolvable:$true] %s298
          %304 = dma.hbm_to_vmem [thread:$0]  %s297, 192, %s299, %s286, 64, 64, 4
        $region44: #{tpu_custom_call.1} parent=39 // pred_fallthru
          _
      $region40: #{tpu_custom_call.1} parent=5 // pred_fallthru
        _
      %p305 = scmp.le.s32.totalorder 1, %s21
      %p306 = scmp.lt.s32.totalorder %s21, 3
      %p307 = pnand %p305, %p306
      %p308 = pneg %p307
      // Predicated region
      $region45: #{tpu_custom_call.1} parent=5 // pred_check
        _
      $region46: #{tpu_custom_call.1} parent=5 // pred_check_branch
        %310 = sbr.rel (%p307) target = $region48
      $region47: #{tpu_custom_call.1} parent=5 // pred_region
        %s311 = ssub.s32 %s21, 1
        %s312 = sand.u32 %s48, 1
        %s313 = scalar_lea.sflag [#allocation3], %s312
        %s314 = sand.u32 %s48, 1
        %s315 = smul.addr %s314, 12
        %s316 = scalar_lea.vmem [#allocation2], %s315
        // Predicated region
        $region49: #{tpu_custom_call.1} parent=47 // pred_check
          %p317 = pneg %p61
        $region50: #{tpu_custom_call.1} parent=47 // pred_check_branch
          %319 = sbr.rel (%p317) target = $region52
        $region51: #{tpu_custom_call.1} parent=47 // pred_region
          %320 = dma.done %s313, 192
        $region52: #{tpu_custom_call.1} parent=47 // pred_fallthru
          _
        // Predicated region
        $region53: #{tpu_custom_call.1} parent=47 // pred_check
          %p321 = pneg %p82
        $region54: #{tpu_custom_call.1} parent=47 // pred_check_branch
          %323 = sbr.rel (%p321) target = $region56
        $region55: #{tpu_custom_call.1} parent=47 // pred_region
          %324 = dma.done [#allocation6], 3072
        $region56: #{tpu_custom_call.1} parent=47 // pred_fallthru
          _
        // Predicated region
        $region57: #{tpu_custom_call.1} parent=47 // pred_check
          %p325 = pneg %p124
        $region58: #{tpu_custom_call.1} parent=47 // pred_check_branch
          %327 = sbr.rel (%p325) target = $region60
        $region59: #{tpu_custom_call.1} parent=47 // pred_region
          %328 = dma.done [#allocation6], 3072
        $region60: #{tpu_custom_call.1} parent=47 // pred_fallthru
          _
        // Predicated region
        $region61: #{tpu_custom_call.1} parent=47 // pred_check
          %p329 = pneg %p166
        $region62: #{tpu_custom_call.1} parent=47 // pred_check_branch
          %331 = sbr.rel (%p329) target = $region64
        $region63: #{tpu_custom_call.1} parent=47 // pred_region
          %332 = dma.done [#allocation9], 1024
        $region64: #{tpu_custom_call.1} parent=47 // pred_fallthru
          _
        %s333 = sand.u32 %s48, 1
        %s334 = scalar_lea.sflag [#allocation3], %s333
        %s335 = sand.u32 %s48, 1
        %s336 = smul.addr %s335, 12
        %s337 = scalar_lea.vmem [#allocation2], %s336
        %p338 = pneg %p61
        %p339 = pneg %p58
        %p340 = pneg %p82
        %p341 = pneg %p79
        %p342 = pneg %p103
        %p343 = pneg %p100
        %p344 = pneg %p124
        %p345 = pneg %p121
        %p346 = pneg %p145
        %p347 = pneg %p142
        %p348 = pneg %p166
        %p349 = pneg %p163
        %p350 = pneg %p187
        %p351 = pneg %p184
        %p352 = pneg %p215
        %p353 = pneg %p212
        %s354 = sand.u32 %s202, 1
        %s355 = scalar_lea.sflag [#allocation4], %s354
        %s356 = sand.u32 %s202, 1
        %s357 = smul.addr %s356, 8
        %s358 = scalar_lea.vmem [#allocation10], %s357
        %s359 = smul.u32 2, %s31
        %v361 = vld [vmem:[%s316] sm:$0xf]
        %v362 = vld [vmem:[%s316 + $0x4] sm:$0xf]
        %v363 = vld [vmem:[%s316 + $0x8] sm:$0xf]
        %v367 = vunpack.c.l.b16 %v361
        %v368 = vunpack.c.l.b16 %v362
        %v369 = vunpack.c.l.b16 %v363
        %v370 = vpack.c.b16 %v368, %v367
        %v371 = vpack.c.b16 %v369, %v369
        %vm374 = vcmask 1046528
        %v375 = vrot.slane %v370, 1
        %v376 = vrot.slane %v371, 1
        %v377 = vsel %vm374, %v375, %v376
        %vm380 = vcmask 1045504
        %v381 = vrot.slane %v370, 2
        %v382 = vrot.slane %v371, 2
        %v383 = vsel %vm380, %v381, %v382
        %v386 = vld [vmem:[#allocation5] sm:$0xf]
        %v387 = vld [vmem:[#allocation5 + $0x4] sm:$0xf]
        %v388 = vld [vmem:[#allocation5 + $0x8] sm:$0xf]
        %v389 = vld [vmem:[#allocation5 + $0xc] sm:$0xf]
        %v390 = vld [vmem:[#allocation5 + $0x10] sm:$0xf]
        %v391 = vld [vmem:[#allocation5 + $0x14] sm:$0xf]
        %v392 = vld [vmem:[#allocation5 + $0x18] sm:$0xf]
        %v393 = vld [vmem:[#allocation5 + $0x1c] sm:$0xf]
        %v394 = vld [vmem:[#allocation5 + $0x20] sm:$0xf]
        %v395 = vld [vmem:[#allocation5 + $0x24] sm:$0xf]
        %v396 = vld [vmem:[#allocation5 + $0x28] sm:$0xf]
        %v397 = vld [vmem:[#allocation5 + $0x2c] sm:$0xf]
        %v398 = vld [vmem:[#allocation5 + $0x30] sm:$0xf]
        %v399 = vld [vmem:[#allocation5 + $0x34] sm:$0xf]
        %v400 = vld [vmem:[#allocation5 + $0x38] sm:$0xf]
        %v401 = vld [vmem:[#allocation5 + $0x3c] sm:$0xf]
        %v402 = vld [vmem:[#allocation5 + $0x40] sm:$0xf]
        %v403 = vld [vmem:[#allocation5 + $0x44] sm:$0xf]
        %v404 = vld [vmem:[#allocation5 + $0x48] sm:$0xf]
        %v405 = vld [vmem:[#allocation5 + $0x4c] sm:$0xf]
        %v406 = vld [vmem:[#allocation5 + $0x50] sm:$0xf]
        %v407 = vld [vmem:[#allocation5 + $0x54] sm:$0xf]
        %v408 = vld [vmem:[#allocation5 + $0x58] sm:$0xf]
        %v409 = vld [vmem:[#allocation5 + $0x5c] sm:$0xf]
        %v410 = vld [vmem:[#allocation5 + $0x60] sm:$0xf]
        %v411 = vld [vmem:[#allocation5 + $0x64] sm:$0xf]
        %v412 = vld [vmem:[#allocation5 + $0x68] sm:$0xf]
        %v413 = vld [vmem:[#allocation5 + $0x6c] sm:$0xf]
        %v414 = vld [vmem:[#allocation5 + $0x70] sm:$0xf]
        %v415 = vld [vmem:[#allocation5 + $0x74] sm:$0xf]
        %v416 = vld [vmem:[#allocation5 + $0x78] sm:$0xf]
        %v417 = vld [vmem:[#allocation5 + $0x7c] sm:$0xf]
        %v418 = vld [vmem:[#allocation5 + $0x80] sm:$0xf]
        %v419 = vld [vmem:[#allocation5 + $0x84] sm:$0xf]
        %v420 = vld [vmem:[#allocation5 + $0x88] sm:$0xf]
        %v421 = vld [vmem:[#allocation5 + $0x8c] sm:$0xf]
        %v422 = vld [vmem:[#allocation5 + $0x90] sm:$0xf]
        %v423 = vld [vmem:[#allocation5 + $0x94] sm:$0xf]
        %v424 = vld [vmem:[#allocation5 + $0x98] sm:$0xf]
        %v425 = vld [vmem:[#allocation5 + $0x9c] sm:$0xf]
        %v426 = vld [vmem:[#allocation5 + $0xa0] sm:$0xf]
        %v427 = vld [vmem:[#allocation5 + $0xa4] sm:$0xf]
        %v428 = vld [vmem:[#allocation5 + $0xa8] sm:$0xf]
        %v429 = vld [vmem:[#allocation5 + $0xac] sm:$0xf]
        %v430 = vld [vmem:[#allocation5 + $0xb0] sm:$0xf]
        %v431 = vld [vmem:[#allocation5 + $0xb4] sm:$0xf]
        %v432 = vld [vmem:[#allocation5 + $0xb8] sm:$0xf]
        %v433 = vld [vmem:[#allocation5 + $0xbc] sm:$0xf]
        %v434 = vld [vmem:[%s2] sm:$0x1]
        %v436 = vlaneseq
        %v437 = vshrl.u32 %v436, 7
        %v438 = vsub.s32 0, %v437
        %v439 = vrot.slane %v434, %v438
        %v489 = vunpack.c.l.b16 %v386
        %v490 = vunpack.c.l.b16 %v387
        %v491 = vunpack.c.l.b16 %v388
        %v492 = vunpack.c.l.b16 %v389
        %v493 = vunpack.c.l.b16 %v390
        %v494 = vunpack.c.l.b16 %v391
        %v495 = vunpack.c.l.b16 %v392
        %v496 = vunpack.c.l.b16 %v393
        %v497 = vunpack.c.l.b16 %v394
        %v498 = vunpack.c.l.b16 %v395
        %v499 = vunpack.c.l.b16 %v396
        %v500 = vunpack.c.l.b16 %v397
        %v501 = vunpack.c.l.b16 %v398
        %v502 = vunpack.c.l.b16 %v399
        %v503 = vunpack.c.l.b16 %v400
        %v504 = vunpack.c.l.b16 %v401
        %v505 = vunpack.c.l.b16 %v402
        %v506 = vunpack.c.l.b16 %v403
        %v507 = vunpack.c.l.b16 %v404
        %v508 = vunpack.c.l.b16 %v405
        %v509 = vunpack.c.l.b16 %v406
        %v510 = vunpack.c.l.b16 %v407
        %v511 = vunpack.c.l.b16 %v408
        %v512 = vunpack.c.l.b16 %v409
        %v513 = vunpack.c.l.b16 %v410
        %v514 = vunpack.c.l.b16 %v411
        %v515 = vunpack.c.l.b16 %v412
        %v516 = vunpack.c.l.b16 %v413
        %v517 = vunpack.c.l.b16 %v414
        %v518 = vunpack.c.l.b16 %v415
        %v519 = vunpack.c.l.b16 %v416
        %v520 = vunpack.c.l.b16 %v417
        %v521 = vunpack.c.l.b16 %v418
        %v522 = vunpack.c.l.b16 %v419
        %v523 = vunpack.c.l.b16 %v420
        %v524 = vunpack.c.l.b16 %v421
        %v525 = vunpack.c.l.b16 %v422
        %v526 = vunpack.c.l.b16 %v423
        %v527 = vunpack.c.l.b16 %v424
        %v528 = vunpack.c.l.b16 %v425
        %v529 = vunpack.c.l.b16 %v426
        %v530 = vunpack.c.l.b16 %v427
        %v531 = vunpack.c.l.b16 %v428
        %v532 = vunpack.c.l.b16 %v429
        %v533 = vunpack.c.l.b16 %v430
        %v534 = vunpack.c.l.b16 %v431
        %v535 = vunpack.c.l.b16 %v432
        %v536 = vunpack.c.l.b16 %v433
        %v537 = vpack.c.b16 %v490, %v489
        %v538 = vpack.c.b16 %v492, %v491
        %v539 = vpack.c.b16 %v494, %v493
        %v540 = vpack.c.b16 %v496, %v495
        %v541 = vpack.c.b16 %v498, %v497
        %v542 = vpack.c.b16 %v500, %v499
        %v543 = vpack.c.b16 %v502, %v501
        %v544 = vpack.c.b16 %v504, %v503
        %v545 = vpack.c.b16 %v506, %v505
        %v546 = vpack.c.b16 %v508, %v507
        %v547 = vpack.c.b16 %v510, %v509
        %v548 = vpack.c.b16 %v512, %v511
        %v549 = vpack.c.b16 %v514, %v513
        %v550 = vpack.c.b16 %v516, %v515
        %v551 = vpack.c.b16 %v518, %v517
        %v552 = vpack.c.b16 %v520, %v519
        %v553 = vpack.c.b16 %v522, %v521
        %v554 = vpack.c.b16 %v524, %v523
        %v555 = vpack.c.b16 %v526, %v525
        %v556 = vpack.c.b16 %v528, %v527
        %v557 = vpack.c.b16 %v530, %v529
        %v558 = vpack.c.b16 %v532, %v531
        %v559 = vpack.c.b16 %v534, %v533
        %v560 = vpack.c.b16 %v536, %v535
        %585 = vmatprep.subr.bf16.mxu0 0
        %586 = vmatpush1.bf16.msra.mxu0 %v537
        %587 = vmatprep.subr.bf16.mxu0 0
        %588 = vmatpush1.bf16.msra.mxu0 %v538
        %589 = vmatprep.subr.bf16.mxu0 0
        %590 = vmatpush1.bf16.msra.mxu0 %v539
        %591 = vmatprep.subr.bf16.mxu0 0
        %592 = vmatpush1.bf16.msra.mxu0 %v540
        %593 = vmatprep.subr.bf16.mxu0 0
        %594 = vmatpush1.bf16.msra.mxu0 %v541
        %595 = vmatprep.subr.bf16.mxu0 0
        %596 = vmatpush1.bf16.msra.mxu0 %v542
        %597 = vmatprep.subr.bf16.mxu0 0
        %598 = vmatpush1.bf16.msra.mxu0 %v543
        %599 = vmatprep.subr.bf16.mxu0 0
        %600 = vmatpush1.bf16.msra.mxu0 %v544
        %601 = vmatprep.subr.bf16.mxu0 0
        %602 = vmatpush1.bf16.msra.mxu0 %v545
        %603 = vmatprep.subr.bf16.mxu0 0
        %604 = vmatpush1.bf16.msra.mxu0 %v546
        %605 = vmatprep.subr.bf16.mxu0 0
        %606 = vmatpush1.bf16.msra.mxu0 %v547
        %607 = vmatprep.subr.bf16.mxu0 0
        %608 = vmatpush1.bf16.msra.mxu0 %v548
        %609 = vmatprep.subr.bf16.mxu0 0
        %610 = vmatpush1.bf16.msra.mxu0 %v549
        %611 = vmatprep.subr.bf16.mxu0 0
        %612 = vmatpush1.bf16.msra.mxu0 %v550
        %613 = vmatprep.subr.bf16.mxu0 0
        %614 = vmatpush1.bf16.msra.mxu0 %v551
        %615 = vmatprep.subr.bf16.mxu0 0
        %616 = vmatpush1.bf16.msra.mxu0 %v552
        %617 = vmatprep.mubr.bf16.mxu0 %v377
        %618 = vmatmul.mubr.bf16.gmra.mrb[0].mxu0 %v370
        %v619 = vpop.f32.mrb[0].mxu0
        %v620 = vadd.f32 %v439, %v619
        %v621 = vpop.f32.mrb[0].mxu0
        %v622 = vpop.f32.mrb[0].mxu0
        %v623 = vadd.f32 %v439, %v622
        %v624 = vpop.f32.mrb[0].mxu0
        %625 = vmatprep.mubr.bf16.mxu0 %v376
        %626 = vmatmul.mubr.bf16.gmra.mrb[0].mxu0 %v371
        %v627 = vpop.f32.mrb[0].mxu0
        %v628 = vadd.f32 %v439, %v627
        %v629 = vpop.f32.mrb[0].mxu0
        %v630 = vpop.f32.mrb[0].mxu0
        %v631 = vpop.f32.mrb[0].mxu0
        %632 = vdwg.mxu0
        %633 = vmatprep.subr.bf16.mxu0 0
        %634 = vmatpush1.bf16.msra.mxu0 %v553
        %635 = vmatprep.subr.bf16.mxu0 0
        %636 = vmatpush1.bf16.msra.mxu0 %v554
        %637 = vmatprep.subr.bf16.mxu0 0
        %638 = vmatpush1.bf16.msra.mxu0 %v555
        %639 = vmatprep.subr.bf16.mxu0 0
        %640 = vmatpush1.bf16.msra.mxu0 %v556
        %641 = vmatprep.subr.bf16.mxu0 0
        %642 = vmatpush1.bf16.msra.mxu0 %v557
        %643 = vmatprep.subr.bf16.mxu0 0
        %644 = vmatpush1.bf16.msra.mxu0 %v558
        %645 = vmatprep.subr.bf16.mxu0 0
        %646 = vmatpush1.bf16.msra.mxu0 %v559
        %647 = vmatprep.subr.bf16.mxu0 0
        %648 = vmatpush1.bf16.msra.mxu0 %v560
        %649 = vmatprep.subr.bf16.mxu0 0
        %650 = vmatpush1.bf16.msra.mxu0 0
        %651 = vmatprep.subr.bf16.mxu0 0
        %652 = vmatpush1.bf16.msra.mxu0 0
        %653 = vmatprep.subr.bf16.mxu0 0
        %654 = vmatpush1.bf16.msra.mxu0 0
        %655 = vmatprep.subr.bf16.mxu0 0
        %656 = vmatpush1.bf16.msra.mxu0 0
        %657 = vmatprep.subr.bf16.mxu0 0
        %658 = vmatpush1.bf16.msra.mxu0 0
        %659 = vmatprep.subr.bf16.mxu0 0
        %660 = vmatpush1.bf16.msra.mxu0 0
        %661 = vmatprep.subr.bf16.mxu0 0
        %662 = vmatpush1.bf16.msra.mxu0 0
        %663 = vmatprep.subr.bf16.mxu0 0
        %664 = vmatpush1.bf16.msra.mxu0 0
        %665 = vmatprep.mubr.bf16.mxu0 0
        %666 = vmatmul.mubr.bf16.gmra.mrb[0].mxu0 %v383
        %v667 = vpop.f32.mrb[0].mxu0
        %v668 = vadd.f32 %v620, %v667
        %v669 = vpop.f32.mrb[0].mxu0
        %v670 = vpop.f32.mrb[0].mxu0
        %v671 = vadd.f32 %v623, %v670
        %v672 = vpop.f32.mrb[0].mxu0
        %673 = vmatprep.mubr.bf16.mxu0 0
        %674 = vmatmul.mubr.bf16.gmra.mrb[0].mxu0 %v382
        %v675 = vpop.f32.mrb[0].mxu0
        %v676 = vadd.f32 %v628, %v675
        %v677 = vpop.f32.mrb[0].mxu0
        %v678 = vpop.f32.mrb[0].mxu0
        %v679 = vpop.f32.mrb[0].mxu0
        %680 = vdwg.mxu0
        %v681 = vmax.f32 %v668, 0.0
        %v682 = vmax.f32 %v671, 0.0
        %v683 = vmax.f32 %v676, 0.0
        %v684 = vlaneseq
        %v685 = vshrl.u32 %v684, 7
        %v686 = vadd.s32 %v685, 8
        %v687 = vadd.s32 %v685, 16
        %s688 = smul.u32 %s31, 16
        %s689 = ssub.s32 %s688, 2
        %v690 = vstv %s689
        %v691 = vadd.s32 %v685, %v690
        %v692 = vadd.s32 %v686, %v690
        %v693 = vadd.s32 %v687, %v690
        %vm694 = vcmp.ge.s32.totalorder %v691, 0
        %vm695 = vcmp.ge.s32.totalorder %v692, 0
        %vm696 = vcmp.ge.s32.totalorder %v693, 0
        %vm697 = vcmp.lt.s32.totalorder %v691, 16
        %vm698 = vcmp.lt.s32.totalorder %v692, 16
        %vm699 = vcmp.lt.s32.totalorder %v693, 16
        %vm700 = vmand %vm694, %vm697
        %vm701 = vmand %vm695, %vm698
        %vm702 = vmand %vm696, %vm699
        %v703 = vsel %vm700, %v681, 0.0
        %v704 = vsel %vm701, %v682, 0.0
        %v705 = vsel %vm702, %v683, 0.0
        %v706 = vld [vmem:[#allocation8] sm:$0xf]
        %v707 = vld [vmem:[#allocation8 + $0x4] sm:$0xf]
        %v708 = vld [vmem:[#allocation8 + $0x8] sm:$0xf]
        %v709 = vld [vmem:[#allocation8 + $0xc] sm:$0xf]
        %v710 = vld [vmem:[#allocation8 + $0x10] sm:$0xf]
        %v711 = vld [vmem:[#allocation8 + $0x14] sm:$0xf]
        %v712 = vld [vmem:[#allocation8 + $0x18] sm:$0xf]
        %v713 = vld [vmem:[#allocation8 + $0x1c] sm:$0xf]
        %v714 = vld [vmem:[#allocation8 + $0x20] sm:$0xf]
        %v715 = vld [vmem:[#allocation8 + $0x24] sm:$0xf]
        %v716 = vld [vmem:[#allocation8 + $0x28] sm:$0xf]
        %v717 = vld [vmem:[#allocation8 + $0x2c] sm:$0xf]
        %v718 = vld [vmem:[#allocation8 + $0x30] sm:$0xf]
        %v719 = vld [vmem:[#allocation8 + $0x34] sm:$0xf]
        %v720 = vld [vmem:[#allocation8 + $0x38] sm:$0xf]
        %v721 = vld [vmem:[#allocation8 + $0x3c] sm:$0xf]
        %v722 = vld [vmem:[%s6] sm:$0x1]
        %v724 = vlaneseq
        %v725 = vshrl.u32 %v724, 7
        %v726 = vsub.s32 0, %v725
        %v727 = vrot.slane %v722, %v726
        %v745 = vunpack.c.l.b16 %v706
        %v746 = vunpack.c.l.b16 %v707
        %v747 = vunpack.c.l.b16 %v708
        %v748 = vunpack.c.l.b16 %v709
        %v749 = vunpack.c.l.b16 %v710
        %v750 = vunpack.c.l.b16 %v711
        %v751 = vunpack.c.l.b16 %v712
        %v752 = vunpack.c.l.b16 %v713
        %v753 = vunpack.c.l.b16 %v714
        %v754 = vunpack.c.l.b16 %v715
        %v755 = vunpack.c.l.b16 %v716
        %v756 = vunpack.c.l.b16 %v717
        %v757 = vunpack.c.l.b16 %v718
        %v758 = vunpack.c.l.b16 %v719
        %v759 = vunpack.c.l.b16 %v720
        %v760 = vunpack.c.l.b16 %v721
        %v761 = vpack.c.b16 %v746, %v745
        %v762 = vpack.c.b16 %v748, %v747
        %v763 = vpack.c.b16 %v750, %v749
        %v764 = vpack.c.b16 %v752, %v751
        %v765 = vpack.c.b16 %v754, %v753
        %v766 = vpack.c.b16 %v756, %v755
        %v767 = vpack.c.b16 %v758, %v757
        %v768 = vpack.c.b16 %v760, %v759
        %777 = vmatprep.subr.bf16.mxu0 0
        %778 = vmatpush1.bf16.msra.mxu0 %v761
        %779 = vmatprep.subr.bf16.mxu0 0
        %780 = vmatpush1.bf16.msra.mxu0 %v762
        %781 = vmatprep.subr.bf16.mxu0 0
        %782 = vmatpush1.bf16.msra.mxu0 %v763
        %783 = vmatprep.subr.bf16.mxu0 0
        %784 = vmatpush1.bf16.msra.mxu0 %v764
        %785 = vmatprep.subr.bf16.mxu0 0
        %786 = vmatpush1.bf16.msra.mxu0 %v765
        %787 = vmatprep.subr.bf16.mxu0 0
        %788 = vmatpush1.bf16.msra.mxu0 %v766
        %789 = vmatprep.subr.bf16.mxu0 0
        %790 = vmatpush1.bf16.msra.mxu0 %v767
        %791 = vmatprep.subr.bf16.mxu0 0
        %792 = vmatpush1.bf16.msra.mxu0 %v768
        %793 = vmatprep.subr.bf16.mxu0 0
        %794 = vmatpush1.bf16.msra.mxu0 0
        %795 = vmatprep.subr.bf16.mxu0 0
        %796 = vmatpush1.bf16.msra.mxu0 0
        %797 = vmatprep.subr.bf16.mxu0 0
        %798 = vmatpush1.bf16.msra.mxu0 0
        %799 = vmatprep.subr.bf16.mxu0 0
        %800 = vmatpush1.bf16.msra.mxu0 0
        %801 = vmatprep.subr.bf16.mxu0 0
        %802 = vmatpush1.bf16.msra.mxu0 0
        %803 = vmatprep.subr.bf16.mxu0 0
        %804 = vmatpush1.bf16.msra.mxu0 0
        %805 = vmatprep.subr.bf16.mxu0 0
        %806 = vmatpush1.bf16.msra.mxu0 0
        %807 = vmatprep.subr.bf16.mxu0 0
        %808 = vmatpush1.bf16.msra.mxu0 0
        %809 = vmatprep.mubr.bf16.mxu0 0
        %810 = vmatmul.mubr.bf16.gmra.mrb[0].mxu0 %v383
        %v811 = vpop.f32.mrb[0].mxu0
        %v812 = vadd.f32 %v727, %v811
        %v813 = vpop.f32.mrb[0].mxu0
        %v814 = vpop.f32.mrb[0].mxu0
        %v815 = vadd.f32 %v727, %v814
        %v816 = vpop.f32.mrb[0].mxu0
        %817 = vdwg.mxu0
        %v818 = vpack.c.bf16 %v704, %v703
        %v819 = vpack.c.bf16 %v705, %v705
        %v822 = vrot.slane %v818, 1
        %v823 = vrot.slane %v819, 1
        %v824 = vsel %vm374, %v822, %v823
        %v826 = vrot.slane %v818, 2
        %v827 = vrot.slane %v819, 2
        %v828 = vsel %vm380, %v826, %v827
        %v830 = vld [vmem:[#allocation7] sm:$0xf]
        %v831 = vld [vmem:[#allocation7 + $0x4] sm:$0xf]
        %v832 = vld [vmem:[#allocation7 + $0x8] sm:$0xf]
        %v833 = vld [vmem:[#allocation7 + $0xc] sm:$0xf]
        %v834 = vld [vmem:[#allocation7 + $0x10] sm:$0xf]
        %v835 = vld [vmem:[#allocation7 + $0x14] sm:$0xf]
        %v836 = vld [vmem:[#allocation7 + $0x18] sm:$0xf]
        %v837 = vld [vmem:[#allocation7 + $0x1c] sm:$0xf]
        %v838 = vld [vmem:[#allocation7 + $0x20] sm:$0xf]
        %v839 = vld [vmem:[#allocation7 + $0x24] sm:$0xf]
        %v840 = vld [vmem:[#allocation7 + $0x28] sm:$0xf]
        %v841 = vld [vmem:[#allocation7 + $0x2c] sm:$0xf]
        %v842 = vld [vmem:[#allocation7 + $0x30] sm:$0xf]
        %v843 = vld [vmem:[#allocation7 + $0x34] sm:$0xf]
        %v844 = vld [vmem:[#allocation7 + $0x38] sm:$0xf]
        %v845 = vld [vmem:[#allocation7 + $0x3c] sm:$0xf]
        %v846 = vld [vmem:[#allocation7 + $0x40] sm:$0xf]
        %v847 = vld [vmem:[#allocation7 + $0x44] sm:$0xf]
        %v848 = vld [vmem:[#allocation7 + $0x48] sm:$0xf]
        %v849 = vld [vmem:[#allocation7 + $0x4c] sm:$0xf]
        %v850 = vld [vmem:[#allocation7 + $0x50] sm:$0xf]
        %v851 = vld [vmem:[#allocation7 + $0x54] sm:$0xf]
        %v852 = vld [vmem:[#allocation7 + $0x58] sm:$0xf]
        %v853 = vld [vmem:[#allocation7 + $0x5c] sm:$0xf]
        %v854 = vld [vmem:[#allocation7 + $0x60] sm:$0xf]
        %v855 = vld [vmem:[#allocation7 + $0x64] sm:$0xf]
        %v856 = vld [vmem:[#allocation7 + $0x68] sm:$0xf]
        %v857 = vld [vmem:[#allocation7 + $0x6c] sm:$0xf]
        %v858 = vld [vmem:[#allocation7 + $0x70] sm:$0xf]
        %v859 = vld [vmem:[#allocation7 + $0x74] sm:$0xf]
        %v860 = vld [vmem:[#allocation7 + $0x78] sm:$0xf]
        %v861 = vld [vmem:[#allocation7 + $0x7c] sm:$0xf]
        %v862 = vld [vmem:[#allocation7 + $0x80] sm:$0xf]
        %v863 = vld [vmem:[#allocation7 + $0x84] sm:$0xf]
        %v864 = vld [vmem:[#allocation7 + $0x88] sm:$0xf]
        %v865 = vld [vmem:[#allocation7 + $0x8c] sm:$0xf]
        %v866 = vld [vmem:[#allocation7 + $0x90] sm:$0xf]
        %v867 = vld [vmem:[#allocation7 + $0x94] sm:$0xf]
        %v868 = vld [vmem:[#allocation7 + $0x98] sm:$0xf]
        %v869 = vld [vmem:[#allocation7 + $0x9c] sm:$0xf]
        %v870 = vld [vmem:[#allocation7 + $0xa0] sm:$0xf]
        %v871 = vld [vmem:[#allocation7 + $0xa4] sm:$0xf]
        %v872 = vld [vmem:[#allocation7 + $0xa8] sm:$0xf]
        %v873 = vld [vmem:[#allocation7 + $0xac] sm:$0xf]
        %v874 = vld [vmem:[#allocation7 + $0xb0] sm:$0xf]
        %v875 = vld [vmem:[#allocation7 + $0xb4] sm:$0xf]
        %v876 = vld [vmem:[#allocation7 + $0xb8] sm:$0xf]
        %v877 = vld [vmem:[#allocation7 + $0xbc] sm:$0xf]
        %v878 = vld [vmem:[%s4] sm:$0x1]
        %v880 = vlaneseq
        %v881 = vshrl.u32 %v880, 7
        %v882 = vsub.s32 0, %v881
        %v883 = vrot.slane %v878, %v882
        %v933 = vunpack.c.l.b16 %v830
        %v934 = vunpack.c.l.b16 %v831
        %v935 = vunpack.c.l.b16 %v832
        %v936 = vunpack.c.l.b16 %v833
        %v937 = vunpack.c.l.b16 %v834
        %v938 = vunpack.c.l.b16 %v835
        %v939 = vunpack.c.l.b16 %v836
        %v940 = vunpack.c.l.b16 %v837
        %v941 = vunpack.c.l.b16 %v838
        %v942 = vunpack.c.l.b16 %v839
        %v943 = vunpack.c.l.b16 %v840
        %v944 = vunpack.c.l.b16 %v841
        %v945 = vunpack.c.l.b16 %v842
        %v946 = vunpack.c.l.b16 %v843
        %v947 = vunpack.c.l.b16 %v844
        %v948 = vunpack.c.l.b16 %v845
        %v949 = vunpack.c.l.b16 %v846
        %v950 = vunpack.c.l.b16 %v847
        %v951 = vunpack.c.l.b16 %v848
        %v952 = vunpack.c.l.b16 %v849
        %v953 = vunpack.c.l.b16 %v850
        %v954 = vunpack.c.l.b16 %v851
        %v955 = vunpack.c.l.b16 %v852
        %v956 = vunpack.c.l.b16 %v853
        %v957 = vunpack.c.l.b16 %v854
        %v958 = vunpack.c.l.b16 %v855
        %v959 = vunpack.c.l.b16 %v856
        %v960 = vunpack.c.l.b16 %v857
        %v961 = vunpack.c.l.b16 %v858
        %v962 = vunpack.c.l.b16 %v859
        %v963 = vunpack.c.l.b16 %v860
        %v964 = vunpack.c.l.b16 %v861
        %v965 = vunpack.c.l.b16 %v862
        %v966 = vunpack.c.l.b16 %v863
        %v967 = vunpack.c.l.b16 %v864
        %v968 = vunpack.c.l.b16 %v865
        %v969 = vunpack.c.l.b16 %v866
        %v970 = vunpack.c.l.b16 %v867
        %v971 = vunpack.c.l.b16 %v868
        %v972 = vunpack.c.l.b16 %v869
        %v973 = vunpack.c.l.b16 %v870
        %v974 = vunpack.c.l.b16 %v871
        %v975 = vunpack.c.l.b16 %v872
        %v976 = vunpack.c.l.b16 %v873
        %v977 = vunpack.c.l.b16 %v874
        %v978 = vunpack.c.l.b16 %v875
        %v979 = vunpack.c.l.b16 %v876
        %v980 = vunpack.c.l.b16 %v877
        %v981 = vpack.c.b16 %v934, %v933
        %v982 = vpack.c.b16 %v936, %v935
        %v983 = vpack.c.b16 %v938, %v937
        %v984 = vpack.c.b16 %v940, %v939
        %v985 = vpack.c.b16 %v942, %v941
        %v986 = vpack.c.b16 %v944, %v943
        %v987 = vpack.c.b16 %v946, %v945
        %v988 = vpack.c.b16 %v948, %v947
        %v989 = vpack.c.b16 %v950, %v949
        %v990 = vpack.c.b16 %v952, %v951
        %v991 = vpack.c.b16 %v954, %v953
        %v992 = vpack.c.b16 %v956, %v955
        %v993 = vpack.c.b16 %v958, %v957
        %v994 = vpack.c.b16 %v960, %v959
        %v995 = vpack.c.b16 %v962, %v961
        %v996 = vpack.c.b16 %v964, %v963
        %v997 = vpack.c.b16 %v966, %v965
        %v998 = vpack.c.b16 %v968, %v967
        %v999 = vpack.c.b16 %v970, %v969
        %v1000 = vpack.c.b16 %v972, %v971
        %v1001 = vpack.c.b16 %v974, %v973
        %v1002 = vpack.c.b16 %v976, %v975
        %v1003 = vpack.c.b16 %v978, %v977
        %v1004 = vpack.c.b16 %v980, %v979
        %1029 = vmatprep.subr.bf16.mxu0 0
        %1030 = vmatpush1.bf16.msra.mxu0 %v981
        %1031 = vmatprep.subr.bf16.mxu0 0
        %1032 = vmatpush1.bf16.msra.mxu0 %v982
        %1033 = vmatprep.subr.bf16.mxu0 0
        %1034 = vmatpush1.bf16.msra.mxu0 %v983
        %1035 = vmatprep.subr.bf16.mxu0 0
        %1036 = vmatpush1.bf16.msra.mxu0 %v984
        %1037 = vmatprep.subr.bf16.mxu0 0
        %1038 = vmatpush1.bf16.msra.mxu0 %v985
        %1039 = vmatprep.subr.bf16.mxu0 0
        %1040 = vmatpush1.bf16.msra.mxu0 %v986
        %1041 = vmatprep.subr.bf16.mxu0 0
        %1042 = vmatpush1.bf16.msra.mxu0 %v987
        %1043 = vmatprep.subr.bf16.mxu0 0
        %1044 = vmatpush1.bf16.msra.mxu0 %v988
        %1045 = vmatprep.subr.bf16.mxu0 0
        %1046 = vmatpush1.bf16.msra.mxu0 %v989
        %1047 = vmatprep.subr.bf16.mxu0 0
        %1048 = vmatpush1.bf16.msra.mxu0 %v990
        %1049 = vmatprep.subr.bf16.mxu0 0
        %1050 = vmatpush1.bf16.msra.mxu0 %v991
        %1051 = vmatprep.subr.bf16.mxu0 0
        %1052 = vmatpush1.bf16.msra.mxu0 %v992
        %1053 = vmatprep.subr.bf16.mxu0 0
        %1054 = vmatpush1.bf16.msra.mxu0 %v993
        %1055 = vmatprep.subr.bf16.mxu0 0
        %1056 = vmatpush1.bf16.msra.mxu0 %v994
        %1057 = vmatprep.subr.bf16.mxu0 0
        %1058 = vmatpush1.bf16.msra.mxu0 %v995
        %1059 = vmatprep.subr.bf16.mxu0 0
        %1060 = vmatpush1.bf16.msra.mxu0 %v996
        %1061 = vmatprep.mubr.bf16.mxu0 %v824
        %1062 = vmatmul.mubr.bf16.gmra.mrb[0].mxu0 %v818
        %v1063 = vpop.f32.mrb[0].mxu0
        %v1064 = vadd.f32 %v883, %v1063
        %v1065 = vpop.f32.mrb[0].mxu0
        %v1066 = vpop.f32.mrb[0].mxu0
        %v1067 = vadd.f32 %v883, %v1066
        %v1068 = vpop.f32.mrb[0].mxu0
        %1069 = vdwg.mxu0
        %1070 = vmatprep.subr.bf16.mxu0 0
        %1071 = vmatpush1.bf16.msra.mxu0 %v997
        %1072 = vmatprep.subr.bf16.mxu0 0
        %1073 = vmatpush1.bf16.msra.mxu0 %v998
        %1074 = vmatprep.subr.bf16.mxu0 0
        %1075 = vmatpush1.bf16.msra.mxu0 %v999
        %1076 = vmatprep.subr.bf16.mxu0 0
        %1077 = vmatpush1.bf16.msra.mxu0 %v1000
        %1078 = vmatprep.subr.bf16.mxu0 0
        %1079 = vmatpush1.bf16.msra.mxu0 %v1001
        %1080 = vmatprep.subr.bf16.mxu0 0
        %1081 = vmatpush1.bf16.msra.mxu0 %v1002
        %1082 = vmatprep.subr.bf16.mxu0 0
        %1083 = vmatpush1.bf16.msra.mxu0 %v1003
        %1084 = vmatprep.subr.bf16.mxu0 0
        %1085 = vmatpush1.bf16.msra.mxu0 %v1004
        %1086 = vmatprep.subr.bf16.mxu0 0
        %1087 = vmatpush1.bf16.msra.mxu0 0
        %1088 = vmatprep.subr.bf16.mxu0 0
        %1089 = vmatpush1.bf16.msra.mxu0 0
        %1090 = vmatprep.subr.bf16.mxu0 0
        %1091 = vmatpush1.bf16.msra.mxu0 0
        %1092 = vmatprep.subr.bf16.mxu0 0
        %1093 = vmatpush1.bf16.msra.mxu0 0
        %1094 = vmatprep.subr.bf16.mxu0 0
        %1095 = vmatpush1.bf16.msra.mxu0 0
        %1096 = vmatprep.subr.bf16.mxu0 0
        %1097 = vmatpush1.bf16.msra.mxu0 0
        %1098 = vmatprep.subr.bf16.mxu0 0
        %1099 = vmatpush1.bf16.msra.mxu0 0
        %1100 = vmatprep.subr.bf16.mxu0 0
        %1101 = vmatpush1.bf16.msra.mxu0 0
        %1102 = vmatprep.mubr.bf16.mxu0 0
        %1103 = vmatmul.mubr.bf16.gmra.mrb[0].mxu0 %v828
        %v1104 = vpop.f32.mrb[0].mxu0
        %v1105 = vadd.f32 %v1064, %v1104
        %v1106 = vpop.f32.mrb[0].mxu0
        %v1107 = vpop.f32.mrb[0].mxu0
        %v1108 = vadd.f32 %v1067, %v1107
        %v1109 = vpop.f32.mrb[0].mxu0
        %1110 = vdwg.mxu0
        %v1111 = vmax.f32 %v1105, 0.0
        %v1112 = vmax.f32 %v1108, 0.0
        %v1113 = vadd.f32 %v1111, %v812
        %v1114 = vadd.f32 %v1112, %v815
        %v1115 = vmax.f32 %v1113, 0.0
        %v1116 = vmax.f32 %v1114, 0.0
        %v1117 = vpack.c.bf16 %v1116, %v1115
        %v1119 = vunpack.c.l.b16 %v1117
        %v1120 = vunpack.c.h.b16 %v1117
        %v1121 = vpack.c.b16 %v1119, %v1119
        %v1122 = vpack.c.b16 %v1120, %v1120
        %1125 = vst [vmem:[%s358] sm:$0xf] %v1121
        %1126 = vst [vmem:[%s358 + $0x4] sm:$0xf] %v1122
        %s1127 = sand.u32 %s202, 1
        %s1128 = scalar_lea.sflag [#allocation4], %s1127
        %s1129 = sand.u32 %s202, 1
        %s1130 = smul.addr %s1129, 8
        %s1131 = scalar_lea.vmem [#allocation10], %s1130
        // Predicated region
        $region65: #{tpu_custom_call.1} parent=47 // pred_check
          %p1132 = pneg %p212
        $region66: #{tpu_custom_call.1} parent=47 // pred_check_branch
          %1134 = sbr.rel (%p1132) target = $region68
        $region67: #{tpu_custom_call.1} parent=47 // pred_region
          %s1135 = smul.u32 2, %s31
          %s1137 = ssub.s32 128, 128
          %1138 = vsyncadd %s1128, %s1137
          %s1139 = smul.addr %s30, 2
          %s1140 = sadd.s32 %s1135, %s1139
          %s1141 = smul.addr %s1140, 64
          %s1142 = scalar_lea.hbm %s7, %s1141
          %s1143 = sshll.u32 %s1131, 4
          %s1144 = int_to_ptr.vmem [resolvable:$true] %s1143
          %1149 = dma.vmem_to_hbm [thread:$0]  %s1144, 128, %s1142, %s1128, 64, 64, 4
        $region68: #{tpu_custom_call.1} parent=47 // pred_fallthru
          _
      $region48: #{tpu_custom_call.1} parent=5 // pred_fallthru
        _
      %p1150 = scmp.le.s32.totalorder 2, %s21
      // Predicated region
      $region69: #{tpu_custom_call.1} parent=5 // pred_check
        %p1151 = pneg %p1150
      $region70: #{tpu_custom_call.1} parent=5 // pred_check_branch
        %1153 = sbr.rel (%p1151) target = $region72
      $region71: #{tpu_custom_call.1} parent=5 // pred_region
        %s1154 = ssub.s32 %s21, 2
        // Predicated region
        $region73: #{tpu_custom_call.1} parent=71 // pred_check
          %p1155 = pneg %p218
        $region74: #{tpu_custom_call.1} parent=71 // pred_check_branch
          %1157 = sbr.rel (%p1155) target = $region76
        $region75: #{tpu_custom_call.1} parent=71 // pred_region
          %s1158 = sand.u32 %s203, 1
          %s1159 = scalar_lea.sflag [#allocation4], %s1158
          %s1160 = sand.u32 %s203, 1
          %s1161 = smul.addr %s1160, 8
          %s1162 = scalar_lea.vmem [#allocation10], %s1161
          %1163 = dma.done %s1159, 128
        $region76: #{tpu_custom_call.1} parent=71 // pred_fallthru
          _
      $region72: #{tpu_custom_call.1} parent=5 // pred_fallthru
        _
    $region6: #{tpu_custom_call.1} parent=1 // loop_footer
      %s25 = sadd.s32 1, %s21
    $region7: #{tpu_custom_call.1} parent=1 // loop_footer_branch
      %20 = sbr.rel target = $region3
    $region8: #{tpu_custom_call.1} parent=1 // loop_exit
      _
    %1164 = vsyncpa [#allocation3], 1
    %s1165 = scalar_lea.sflag [#allocation3], 1
    %1166 = vsyncpa %s1165, 1
    %1167 = vsyncpa [#allocation6], 1
    %1168 = vsyncpa [#allocation9], 1
    %1169 = vsyncpa [#allocation4], 1
    %s1170 = scalar_lea.sflag [#allocation4], 1
    %1171 = vsyncpa %s1170, 1

// kernel: tpu_custom_call.1
$region0: #{tpu_custom_call.1}
  #allocation0 [shape = 'u32[]', space=smem, size = 0x4, offset = 0x4, fixed_abs, tag = 'smem constant byte address 0x4 - core index']
  #allocation1 [shape = 'u32[144,128]{1,0:T(1,128)}', space=vmem, size = 0x12000, scoped, tag = 'internal scratch']
  %s0 = inlined_call_operand.hbm [shape: bf16[2,1,24,128], index: 0, kind: input, shape index: {}]
  %s1 = inlined_call_operand.hbm [shape: bf16[384,128], index: 1, kind: input, shape index: {}]
  %s2 = inlined_call_operand.vmem [shape: f32[1,128], index: 2, kind: input, shape index: {}]
  %s3 = inlined_call_operand.hbm [shape: bf16[384,128], index: 3, kind: input, shape index: {}]
  %s4 = inlined_call_operand.vmem [shape: f32[1,128], index: 4, kind: input, shape index: {}]
  %s5 = inlined_call_operand.hbm [shape: bf16[128,128], index: 5, kind: input, shape index: {}]
  %s6 = inlined_call_operand.vmem [shape: f32[1,128], index: 6, kind: input, shape index: {}]
  %s7 = inlined_call_operand.hbm [shape: bf16[2,16,128], index: 7, kind: output, shape index: {}]
  %s8 = sld [smem:[#allocation0]]
  $region77: #{tpu_custom_call.1} parent=0
    _
  %s10 = ssub.s32 1, %s8
  %s11 = scalar_select 0, %s10, %s8
  $region1: #{tpu_custom_call.1} parent=0
    #allocation2 [shape = 'u8[12288]{0}', space=vmem, size = 0x3000, scoped, tag = 'input window, operand 0']
    #allocation3 [shape = 's32[2]{0}', space=sflag, size = 0x8, scoped, tag = 'scoped memory for tpu_custom_call.1']
    #allocation4 [shape = 's32[2]{0}', space=sflag, size = 0x8, scoped, tag = 'scoped memory for tpu_custom_call.1']
    #allocation5 [shape = 'u8[98304]{0}', space=vmem, size = 0x18000, scoped, tag = 'input window, operand 1, single buffered']
    #allocation6 [shape = 's32[1]{0}', space=sflag, size = 0x4, scoped, tag = 'scoped memory for tpu_custom_call.1']
    #allocation7 [shape = 'u8[98304]{0}', space=vmem, size = 0x18000, scoped, tag = 'input window, operand 3, single buffered']
    #allocation8 [shape = 'u8[32768]{0}', space=vmem, size = 0x8000, scoped, tag = 'input window, operand 5, single buffered']
    #allocation9 [shape = 's32[1]{0}', space=sflag, size = 0x4, scoped, tag = 'scoped memory for tpu_custom_call.1']
    #allocation10 [shape = 'u8[8192]{0}', space=vmem, size = 0x2000, scoped, tag = 'output window, operand 0']
    %12 = vsyncpa [#allocation3], 0
    %s13 = scalar_lea.sflag [#allocation3], 1
    %14 = vsyncpa %s13, 0
    %15 = vsyncpa [#allocation6], 0
    %16 = vsyncpa [#allocation9], 0
    %17 = vsyncpa [#allocation4], 0
    %s18 = scalar_lea.sflag [#allocation4], 1
    %19 = vsyncpa %s18, 0
    loop: start=0, step=1, limit=4
    $region2: #{tpu_custom_call.1} parent=1 // loop_pre_header
      _
    $region3: #{tpu_custom_call.1} parent=1 // loop_header
      %s21 = sphi 0, %s25
      %p22 = scmp.ge.s32.totalorder %s21, 4
      %s28 = sphi 0, %s40
      %s29 = sphi 0, %s36
      %s30 = sphi 0, %s28
      %s31 = sphi 0, %s29
      %s32 = sphi 0, %s30
      %s33 = sphi 0, %s31
      %s45 = sphi 0, %s47
      %s48 = sphi 0, %s45
      %s49 = sphi 0, %s48
      %s65 = sphi 0, %s49
      %s69 = sphi 0, %s69
      %s71 = sphi 0, %s69
      %s72 = sphi 0, %s71
      %s86 = sphi 0, %s72
      %s90 = sphi 0, %s90
      %s92 = sphi 0, %s90
      %s93 = sphi 0, %s92
      %s107 = sphi 0, %s93
      %s111 = sphi 0, %s111
      %s113 = sphi 0, %s111
      %s114 = sphi 0, %s113
      %s128 = sphi 0, %s114
      %s132 = sphi 0, %s132
      %s134 = sphi 0, %s132
      %s135 = sphi 0, %s134
      %s149 = sphi 0, %s135
      %s153 = sphi 0, %s153
      %s155 = sphi 0, %s153
      %s156 = sphi 0, %s155
      %s170 = sphi 0, %s156
      %s174 = sphi 0, %s174
      %s176 = sphi 0, %s174
      %s177 = sphi 0, %s176
      %s191 = sphi 0, %s177
      %s199 = sphi 0, %s201
      %s202 = sphi 0, %s199
      %s203 = sphi 0, %s202
      %s219 = sphi 0, %s203
    $region4: #{tpu_custom_call.1} parent=1 // loop_header_branch
      %24 = sbr.rel (%p22) target = $region8
    $region5: #{tpu_custom_call.1} parent=1 // loop_body
      %s26 = ssub.s32 %s21, 1
      %s27 = ssub.s32 %s21, 2
      %s34 = sadd.s32 1, %s29
      %p35 = scmp.ge.s32.totalorder %s34, 1
      %s36 = scalar_select %p35, 0, %s34
      %s37 = sadd.s32 1, %s28
      %s38 = scalar_select %p35, %s37, %s28
      %p39 = scmp.ge.s32.totalorder %s38, 2
      %s40 = scalar_select %p39, 0, %s38
      %s41 = ssub.s32 %s28, %s40
      %s42 = ssub.s32 %s29, %s36
      %s43 = sor.u32 %s41, %s42
      %p44 = scmp.eq.s32.totalorder %s43, 0
      %s46 = sadd.s32 %s45, 1
      %s47 = scalar_select %p44, %s45, %s46
      %p50 = pneg %p44
      %p51 = scmp.eq.s32.totalorder %s21, 1
      %p52 = por %p50, %p51
      %p53 = scmp.ne.s32.totalorder %s45, %s48
      %p54 = scmp.eq.s32.totalorder %s21, 0
      %p55 = por %p53, %p54
      %p56 = scmp.ne.s32.totalorder %s45, %s48
      %p57 = scmp.eq.s32.totalorder %s26, 1
      %p58 = por %p56, %p57
      %p59 = scmp.ne.s32.totalorder %s48, %s49
      %p60 = scmp.eq.s32.totalorder %s26, 0
      %p61 = por %p59, %p60
      %p62 = scmp.ne.s32.totalorder %s48, %s49
      %p63 = scmp.eq.s32.totalorder %s27, 1
      %p64 = por %p62, %p63
      %p66 = scmp.ne.s32.totalorder %s49, %s65
      %p67 = scmp.eq.s32.totalorder %s27, 0
      %p68 = por %p66, %p67
      %s70 = sadd.s32 %s69, 1
      %p73 = scmp.eq.s32.totalorder %s21, 1
      %p74 = scmp.ne.s32.totalorder %s69, %s71
      %p75 = scmp.eq.s32.totalorder %s21, 0
      %p76 = por %p74, %p75
      %p77 = scmp.ne.s32.totalorder %s69, %s71
      %p78 = scmp.eq.s32.totalorder %s26, 1
      %p79 = por %p77, %p78
      %p80 = scmp.ne.s32.totalorder %s71, %s72
      %p81 = scmp.eq.s32.totalorder %s26, 0
      %p82 = por %p80, %p81
      %p83 = scmp.ne.s32.totalorder %s71, %s72
      %p84 = scmp.eq.s32.totalorder %s27, 1
      %p85 = por %p83, %p84
      %p87 = scmp.ne.s32.totalorder %s72, %s86
      %p88 = scmp.eq.s32.totalorder %s27, 0
      %p89 = por %p87, %p88
      %s91 = sadd.s32 %s90, 1
      %p94 = scmp.eq.s32.totalorder %s21, 1
      %p95 = scmp.ne.s32.totalorder %s90, %s92
      %p96 = scmp.eq.s32.totalorder %s21, 0
      %p97 = por %p95, %p96
      %p98 = scmp.ne.s32.totalorder %s90, %s92
      %p99 = scmp.eq.s32.totalorder %s26, 1
      %p100 = por %p98, %p99
      %p101 = scmp.ne.s32.totalorder %s92, %s93
      %p102 = scmp.eq.s32.totalorder %s26, 0
      %p103 = por %p101, %p102
      %p104 = scmp.ne.s32.totalorder %s92, %s93
      %p105 = scmp.eq.s32.totalorder %s27, 1
      %p106 = por %p104, %p105
      %p108 = scmp.ne.s32.totalorder %s93, %s107
      %p109 = scmp.eq.s32.totalorder %s27, 0
      %p110 = por %p108, %p109
      %s112 = sadd.s32 %s111, 1
      %p115 = scmp.eq.s32.totalorder %s21, 1
      %p116 = scmp.ne.s32.totalorder %s111, %s113
      %p117 = scmp.eq.s32.totalorder %s21, 0
      %p118 = por %p116, %p117
      %p119 = scmp.ne.s32.totalorder %s111, %s113
      %p120 = scmp.eq.s32.totalorder %s26, 1
      %p121 = por %p119, %p120
      %p122 = scmp.ne.s32.totalorder %s113, %s114
      %p123 = scmp.eq.s32.totalorder %s26, 0
      %p124 = por %p122, %p123
      %p125 = scmp.ne.s32.totalorder %s113, %s114
      %p126 = scmp.eq.s32.totalorder %s27, 1
      %p127 = por %p125, %p126
      %p129 = scmp.ne.s32.totalorder %s114, %s128
      %p130 = scmp.eq.s32.totalorder %s27, 0
      %p131 = por %p129, %p130
      %s133 = sadd.s32 %s132, 1
      %p136 = scmp.eq.s32.totalorder %s21, 1
      %p137 = scmp.ne.s32.totalorder %s132, %s134
      %p138 = scmp.eq.s32.totalorder %s21, 0
      %p139 = por %p137, %p138
      %p140 = scmp.ne.s32.totalorder %s132, %s134
      %p141 = scmp.eq.s32.totalorder %s26, 1
      %p142 = por %p140, %p141
      %p143 = scmp.ne.s32.totalorder %s134, %s135
      %p144 = scmp.eq.s32.totalorder %s26, 0
      %p145 = por %p143, %p144
      %p146 = scmp.ne.s32.totalorder %s134, %s135
      %p147 = scmp.eq.s32.totalorder %s27, 1
      %p148 = por %p146, %p147
      %p150 = scmp.ne.s32.totalorder %s135, %s149
      %p151 = scmp.eq.s32.totalorder %s27, 0
      %p152 = por %p150, %p151
      %s154 = sadd.s32 %s153, 1
      %p157 = scmp.eq.s32.totalorder %s21, 1
      %p158 = scmp.ne.s32.totalorder %s153, %s155
      %p159 = scmp.eq.s32.totalorder %s21, 0
      %p160 = por %p158, %p159
      %p161 = scmp.ne.s32.totalorder %s153, %s155
      %p162 = scmp.eq.s32.totalorder %s26, 1
      %p163 = por %p161, %p162
      %p164 = scmp.ne.s32.totalorder %s155, %s156
      %p165 = scmp.eq.s32.totalorder %s26, 0
      %p166 = por %p164, %p165
      %p167 = scmp.ne.s32.totalorder %s155, %s156
      %p168 = scmp.eq.s32.totalorder %s27, 1
      %p169 = por %p167, %p168
      %p171 = scmp.ne.s32.totalorder %s156, %s170
      %p172 = scmp.eq.s32.totalorder %s27, 0
      %p173 = por %p171, %p172
      %s175 = sadd.s32 %s174, 1
      %p178 = scmp.eq.s32.totalorder %s21, 1
      %p179 = scmp.ne.s32.totalorder %s174, %s176
      %p180 = scmp.eq.s32.totalorder %s21, 0
      %p181 = por %p179, %p180
      %p182 = scmp.ne.s32.totalorder %s174, %s176
      %p183 = scmp.eq.s32.totalorder %s26, 1
      %p184 = por %p182, %p183
      %p185 = scmp.ne.s32.totalorder %s176, %s177
      %p186 = scmp.eq.s32.totalorder %s26, 0
      %p187 = por %p185, %p186
      %p188 = scmp.ne.s32.totalorder %s176, %s177
      %p189 = scmp.eq.s32.totalorder %s27, 1
      %p190 = por %p188, %p189
      %p192 = scmp.ne.s32.totalorder %s177, %s191
      %p193 = scmp.eq.s32.totalorder %s27, 0
      %p194 = por %p192, %p193
      %s195 = ssub.s32 %s28, %s40
      %s196 = ssub.s32 %s29, %s36
      %s197 = sor.u32 %s195, %s196
      %p198 = scmp.eq.s32.totalorder %s197, 0
      %s200 = sadd.s32 %s199, 1
      %s201 = scalar_select %p198, %s199, %s200
      %p204 = pneg %p198
      %p205 = scmp.eq.s32.totalorder %s21, 1
      %p206 = por %p204, %p205
      %p207 = scmp.ne.s32.totalorder %s199, %s202
      %p208 = scmp.eq.s32.totalorder %s21, 0
      %p209 = por %p207, %p208
      %p210 = scmp.ne.s32.totalorder %s199, %s202
      %p211 = scmp.eq.s32.totalorder %s26, 1
      %p212 = por %p210, %p211
      %p213 = scmp.ne.s32.totalorder %s202, %s203
      %p214 = scmp.eq.s32.totalorder %s26, 0
      %p215 = por %p213, %p214
      %p216 = scmp.ne.s32.totalorder %s202, %s203
      %p217 = scmp.eq.s32.totalorder %s27, 1
      %p218 = por %p216, %p217
      %p220 = scmp.ne.s32.totalorder %s203, %s219
      %p221 = scmp.eq.s32.totalorder %s27, 0
      %p222 = por %p220, %p221
      %p223 = scmp.le.s32.totalorder 1, %s21
      %p224 = scmp.lt.s32.totalorder %s21, 3
      %p225 = pnand %p223, %p224
      %p226 = pneg %p225
      // Predicated region
      $region9: #{tpu_custom_call.1} parent=5 // pred_check
        _
      $region10: #{tpu_custom_call.1} parent=5 // pred_check_branch
        %228 = sbr.rel (%p225) target = $region12
      $region11: #{tpu_custom_call.1} parent=5 // pred_region
        %s229 = ssub.s32 %s21, 1
        // Predicated region
        $region13: #{tpu_custom_call.1} parent=11 // pred_check
          %p230 = pneg %p82
        $region14: #{tpu_custom_call.1} parent=11 // pred_check_branch
          %232 = sbr.rel (%p230) target = $region16
        $region15: #{tpu_custom_call.1} parent=11 // pred_region
          %s234 = ssub.s32 3072, 3072
          %235 = vsyncadd [#allocation6], %s234
          %s236 = sshll.u32 [#allocation5], 4
          %s237 = int_to_ptr.vmem [resolvable:$true] %s236
          %242 = dma.hbm_to_vmem [thread:$0]  %s1, 3072, %s237, [#allocation6], 64, 64, 4
        $region16: #{tpu_custom_call.1} parent=11 // pred_fallthru
          _
        // Predicated region
        $region17: #{tpu_custom_call.1} parent=11 // pred_check
          %p243 = pneg %p103
        $region18: #{tpu_custom_call.1} parent=11 // pred_check_branch
          %245 = sbr.rel (%p243) target = $region20
        $region19: #{tpu_custom_call.1} parent=11 // pred_region
          _
        $region20: #{tpu_custom_call.1} parent=11 // pred_fallthru
          _
        // Predicated region
        $region21: #{tpu_custom_call.1} parent=11 // pred_check
          %p246 = pneg %p124
        $region22: #{tpu_custom_call.1} parent=11 // pred_check_branch
          %248 = sbr.rel (%p246) target = $region24
        $region23: #{tpu_custom_call.1} parent=11 // pred_region
          %s250 = ssub.s32 3072, 3072
          %251 = vsyncadd [#allocation6], %s250
          %s252 = sshll.u32 [#allocation7], 4
          %s253 = int_to_ptr.vmem [resolvable:$true] %s252
          %258 = dma.hbm_to_vmem [thread:$0]  %s3, 3072, %s253, [#allocation6], 64, 64, 4
        $region24: #{tpu_custom_call.1} parent=11 // pred_fallthru
          _
        // Predicated region
        $region25: #{tpu_custom_call.1} parent=11 // pred_check
          %p259 = pneg %p145
        $region26: #{tpu_custom_call.1} parent=11 // pred_check_branch
          %261 = sbr.rel (%p259) target = $region28
        $region27: #{tpu_custom_call.1} parent=11 // pred_region
          _
        $region28: #{tpu_custom_call.1} parent=11 // pred_fallthru
          _
        // Predicated region
        $region29: #{tpu_custom_call.1} parent=11 // pred_check
          %p262 = pneg %p166
        $region30: #{tpu_custom_call.1} parent=11 // pred_check_branch
          %264 = sbr.rel (%p262) target = $region32
        $region31: #{tpu_custom_call.1} parent=11 // pred_region
          %s266 = ssub.s32 1024, 1024
          %267 = vsyncadd [#allocation9], %s266
          %s268 = sshll.u32 [#allocation8], 4
          %s269 = int_to_ptr.vmem [resolvable:$true] %s268
          %274 = dma.hbm_to_vmem [thread:$0]  %s5, 1024, %s269, [#allocation9], 64, 64, 4
        $region32: #{tpu_custom_call.1} parent=11 // pred_fallthru
          _
        // Predicated region
        $region33: #{tpu_custom_call.1} parent=11 // pred_check
          %p275 = pneg %p187
        $region34: #{tpu_custom_call.1} parent=11 // pred_check_branch
          %277 = sbr.rel (%p275) target = $region36
        $region35: #{tpu_custom_call.1} parent=11 // pred_region
          _
        $region36: #{tpu_custom_call.1} parent=11 // pred_fallthru
          _
      $region12: #{tpu_custom_call.1} parent=5 // pred_fallthru
        _
      %p278 = scmp.lt.s32.totalorder %s21, 2
      // Predicated region
      $region37: #{tpu_custom_call.1} parent=5 // pred_check
        %p279 = pneg %p278
      $region38: #{tpu_custom_call.1} parent=5 // pred_check_branch
        %281 = sbr.rel (%p279) target = $region40
      $region39: #{tpu_custom_call.1} parent=5 // pred_region
        // Predicated region
        $region41: #{tpu_custom_call.1} parent=39 // pred_check
          %p282 = pneg %p55
        $region42: #{tpu_custom_call.1} parent=39 // pred_check_branch
          %284 = sbr.rel (%p282) target = $region44
        $region43: #{tpu_custom_call.1} parent=39 // pred_region
          %s285 = sand.u32 %s45, 1
          %s286 = scalar_lea.sflag [#allocation3], %s285
          %s287 = sand.u32 %s45, 1
          %s288 = smul.addr %s287, 12
          %s289 = scalar_lea.vmem [#allocation2], %s288
          %s291 = ssub.s32 192, 192
          %292 = vsyncadd %s286, %s291
          %s293 = smul.addr %s29, 3
          %s294 = smul.addr %s28, 3
          %s295 = sadd.s32 %s293, %s294
          %s296 = smul.addr %s295, 64
          %s297 = scalar_lea.hbm %s0, %s296
          %s298 = sshll.u32 %s289, 4
          %s299 = int_to_ptr.vmem [resolvable:$true] %s298
          %304 = dma.hbm_to_vmem [thread:$0]  %s297, 192, %s299, %s286, 64, 64, 4
        $region44: #{tpu_custom_call.1} parent=39 // pred_fallthru
          _
      $region40: #{tpu_custom_call.1} parent=5 // pred_fallthru
        _
      %p305 = scmp.le.s32.totalorder 1, %s21
      %p306 = scmp.lt.s32.totalorder %s21, 3
      %p307 = pnand %p305, %p306
      %p308 = pneg %p307
      // Predicated region
      $region45: #{tpu_custom_call.1} parent=5 // pred_check
        _
      $region46: #{tpu_custom_call.1} parent=5 // pred_check_branch
        %310 = sbr.rel (%p307) target = $region48
      $region47: #{tpu_custom_call.1} parent=5 // pred_region
        %s311 = ssub.s32 %s21, 1
        %s312 = sand.u32 %s48, 1
        %s313 = scalar_lea.sflag [#allocation3], %s312
        %s314 = sand.u32 %s48, 1
        %s315 = smul.addr %s314, 12
        %s316 = scalar_lea.vmem [#allocation2], %s315
        // Predicated region
        $region49: #{tpu_custom_call.1} parent=47 // pred_check
          %p317 = pneg %p61
        $region50: #{tpu_custom_call.1} parent=47 // pred_check_branch
          %319 = sbr.rel (%p317) target = $region52
        $region51: #{tpu_custom_call.1} parent=47 // pred_region
          %320 = dma.done %s313, 192
        $region52: #{tpu_custom_call.1} parent=47 // pred_fallthru
          _
        // Predicated region
        $region53: #{tpu_custom_call.1} parent=47 // pred_check
          %p321 = pneg %p82
        $region54: #{tpu_custom_call.1} parent=47 // pred_check_branch
          %323 = sbr.rel (%p321) target = $region56
        $region55: #{tpu_custom_call.1} parent=47 // pred_region
          %324 = dma.done [#allocation6], 3072
        $region56: #{tpu_custom_call.1} parent=47 // pred_fallthru
          _
        // Predicated region
        $region57: #{tpu_custom_call.1} parent=47 // pred_check
          %p325 = pneg %p124
        $region58: #{tpu_custom_call.1} parent=47 // pred_check_branch
          %327 = sbr.rel (%p325) target = $region60
        $region59: #{tpu_custom_call.1} parent=47 // pred_region
          %328 = dma.done [#allocation6], 3072
        $region60: #{tpu_custom_call.1} parent=47 // pred_fallthru
          _
        // Predicated region
        $region61: #{tpu_custom_call.1} parent=47 // pred_check
          %p329 = pneg %p166
        $region62: #{tpu_custom_call.1} parent=47 // pred_check_branch
          %331 = sbr.rel (%p329) target = $region64
        $region63: #{tpu_custom_call.1} parent=47 // pred_region
          %332 = dma.done [#allocation9], 1024
        $region64: #{tpu_custom_call.1} parent=47 // pred_fallthru
          _
        %s333 = sand.u32 %s48, 1
        %s334 = scalar_lea.sflag [#allocation3], %s333
        %s335 = sand.u32 %s48, 1
        %s336 = smul.addr %s335, 12
        %s337 = scalar_lea.vmem [#allocation2], %s336
        %p338 = pneg %p61
        %p339 = pneg %p58
        %p340 = pneg %p82
        %p341 = pneg %p79
        %p342 = pneg %p103
        %p343 = pneg %p100
        %p344 = pneg %p124
        %p345 = pneg %p121
        %p346 = pneg %p145
        %p347 = pneg %p142
        %p348 = pneg %p166
        %p349 = pneg %p163
        %p350 = pneg %p187
        %p351 = pneg %p184
        %p352 = pneg %p215
        %p353 = pneg %p212
        %s354 = sand.u32 %s202, 1
        %s355 = scalar_lea.sflag [#allocation4], %s354
        %s356 = sand.u32 %s202, 1
        %s357 = smul.addr %s356, 8
        %s358 = scalar_lea.vmem [#allocation10], %s357
        %s359 = smul.u32 2, %s31
        %v361 = vld [vmem:[%s316] sm:$0xf]
        %v362 = vld [vmem:[%s316 + $0x4] sm:$0xf]
        %v363 = vld [vmem:[%s316 + $0x8] sm:$0xf]
        %v367 = vunpack.c.l.b16 %v361
        %v368 = vunpack.c.l.b16 %v362
        %v369 = vunpack.c.l.b16 %v363
        %v370 = vpack.c.b16 %v368, %v367
        %v371 = vpack.c.b16 %v369, %v369
        %vm374 = vcmask 1046528
        %v375 = vrot.slane %v370, 1
        %v376 = vrot.slane %v371, 1
        %v377 = vsel %vm374, %v375, %v376
        %vm380 = vcmask 1045504
        %v381 = vrot.slane %v370, 2
        %v382 = vrot.slane %v371, 2
        %v383 = vsel %vm380, %v381, %v382
        %v386 = vld [vmem:[#allocation5] sm:$0xf]
        %v387 = vld [vmem:[#allocation5 + $0x4] sm:$0xf]
        %v388 = vld [vmem:[#allocation5 + $0x8] sm:$0xf]
        %v389 = vld [vmem:[#allocation5 + $0xc] sm:$0xf]
        %v390 = vld [vmem:[#allocation5 + $0x10] sm:$0xf]
        %v391 = vld [vmem:[#allocation5 + $0x14] sm:$0xf]
        %v392 = vld [vmem:[#allocation5 + $0x18] sm:$0xf]
        %v393 = vld [vmem:[#allocation5 + $0x1c] sm:$0xf]
        %v394 = vld [vmem:[#allocation5 + $0x20] sm:$0xf]
        %v395 = vld [vmem:[#allocation5 + $0x24] sm:$0xf]
        %v396 = vld [vmem:[#allocation5 + $0x28] sm:$0xf]
        %v397 = vld [vmem:[#allocation5 + $0x2c] sm:$0xf]
        %v398 = vld [vmem:[#allocation5 + $0x30] sm:$0xf]
        %v399 = vld [vmem:[#allocation5 + $0x34] sm:$0xf]
        %v400 = vld [vmem:[#allocation5 + $0x38] sm:$0xf]
        %v401 = vld [vmem:[#allocation5 + $0x3c] sm:$0xf]
        %v402 = vld [vmem:[#allocation5 + $0x40] sm:$0xf]
        %v403 = vld [vmem:[#allocation5 + $0x44] sm:$0xf]
        %v404 = vld [vmem:[#allocation5 + $0x48] sm:$0xf]
        %v405 = vld [vmem:[#allocation5 + $0x4c] sm:$0xf]
        %v406 = vld [vmem:[#allocation5 + $0x50] sm:$0xf]
        %v407 = vld [vmem:[#allocation5 + $0x54] sm:$0xf]
        %v408 = vld [vmem:[#allocation5 + $0x58] sm:$0xf]
        %v409 = vld [vmem:[#allocation5 + $0x5c] sm:$0xf]
        %v410 = vld [vmem:[#allocation5 + $0x60] sm:$0xf]
        %v411 = vld [vmem:[#allocation5 + $0x64] sm:$0xf]
        %v412 = vld [vmem:[#allocation5 + $0x68] sm:$0xf]
        %v413 = vld [vmem:[#allocation5 + $0x6c] sm:$0xf]
        %v414 = vld [vmem:[#allocation5 + $0x70] sm:$0xf]
        %v415 = vld [vmem:[#allocation5 + $0x74] sm:$0xf]
        %v416 = vld [vmem:[#allocation5 + $0x78] sm:$0xf]
        %v417 = vld [vmem:[#allocation5 + $0x7c] sm:$0xf]
        %v418 = vld [vmem:[#allocation5 + $0x80] sm:$0xf]
        %v419 = vld [vmem:[#allocation5 + $0x84] sm:$0xf]
        %v420 = vld [vmem:[#allocation5 + $0x88] sm:$0xf]
        %v421 = vld [vmem:[#allocation5 + $0x8c] sm:$0xf]
        %v422 = vld [vmem:[#allocation5 + $0x90] sm:$0xf]
        %v423 = vld [vmem:[#allocation5 + $0x94] sm:$0xf]
        %v424 = vld [vmem:[#allocation5 + $0x98] sm:$0xf]
        %v425 = vld [vmem:[#allocation5 + $0x9c] sm:$0xf]
        %v426 = vld [vmem:[#allocation5 + $0xa0] sm:$0xf]
        %v427 = vld [vmem:[#allocation5 + $0xa4] sm:$0xf]
        %v428 = vld [vmem:[#allocation5 + $0xa8] sm:$0xf]
        %v429 = vld [vmem:[#allocation5 + $0xac] sm:$0xf]
        %v430 = vld [vmem:[#allocation5 + $0xb0] sm:$0xf]
        %v431 = vld [vmem:[#allocation5 + $0xb4] sm:$0xf]
        %v432 = vld [vmem:[#allocation5 + $0xb8] sm:$0xf]
        %v433 = vld [vmem:[#allocation5 + $0xbc] sm:$0xf]
        %v434 = vld [vmem:[%s2] sm:$0x1]
        %v436 = vlaneseq
        %v437 = vshrl.u32 %v436, 7
        %v438 = vsub.s32 0, %v437
        %v439 = vrot.slane %v434, %v438
        %v489 = vunpack.c.l.b16 %v386
        %v490 = vunpack.c.l.b16 %v387
        %v491 = vunpack.c.l.b16 %v388
        %v492 = vunpack.c.l.b16 %v389
        %v493 = vunpack.c.l.b16 %v390
        %v494 = vunpack.c.l.b16 %v391
        %v495 = vunpack.c.l.b16 %v392
        %v496 = vunpack.c.l.b16 %v393
        %v497 = vunpack.c.l.b16 %v394
        %v498 = vunpack.c.l.b16 %v395
        %v499 = vunpack.c.l.b16 %v396
        %v500 = vunpack.c.l.b16 %v397
        %v501 = vunpack.c.l.b16 %v398
        %v502 = vunpack.c.l.b16 %v399
        %v503 = vunpack.c.l.b16 %v400
        %v504 = vunpack.c.l.b16 %v401
        %v505 = vunpack.c.l.b16 %v402
        %v506 = vunpack.c.l.b16 %v403
        %v507 = vunpack.c.l.b16 %v404
        %v508 = vunpack.c.l.b16 %v405
        %v509 = vunpack.c.l.b16 %v406
        %v510 = vunpack.c.l.b16 %v407
        %v511 = vunpack.c.l.b16 %v408
        %v512 = vunpack.c.l.b16 %v409
        %v513 = vunpack.c.l.b16 %v410
        %v514 = vunpack.c.l.b16 %v411
        %v515 = vunpack.c.l.b16 %v412
        %v516 = vunpack.c.l.b16 %v413
        %v517 = vunpack.c.l.b16 %v414
        %v518 = vunpack.c.l.b16 %v415
        %v519 = vunpack.c.l.b16 %v416
        %v520 = vunpack.c.l.b16 %v417
        %v521 = vunpack.c.l.b16 %v418
        %v522 = vunpack.c.l.b16 %v419
        %v523 = vunpack.c.l.b16 %v420
        %v524 = vunpack.c.l.b16 %v421
        %v525 = vunpack.c.l.b16 %v422
        %v526 = vunpack.c.l.b16 %v423
        %v527 = vunpack.c.l.b16 %v424
        %v528 = vunpack.c.l.b16 %v425
        %v529 = vunpack.c.l.b16 %v426
        %v530 = vunpack.c.l.b16 %v427
        %v531 = vunpack.c.l.b16 %v428
        %v532 = vunpack.c.l.b16 %v429
        %v533 = vunpack.c.l.b16 %v430
        %v534 = vunpack.c.l.b16 %v431
        %v535 = vunpack.c.l.b16 %v432
        %v536 = vunpack.c.l.b16 %v433
        %v537 = vpack.c.b16 %v490, %v489
        %v538 = vpack.c.b16 %v492, %v491
        %v539 = vpack.c.b16 %v494, %v493
        %v540 = vpack.c.b16 %v496, %v495
        %v541 = vpack.c.b16 %v498, %v497
        %v542 = vpack.c.b16 %v500, %v499
        %v543 = vpack.c.b16 %v502, %v501
        %v544 = vpack.c.b16 %v504, %v503
        %v545 = vpack.c.b16 %v506, %v505
        %v546 = vpack.c.b16 %v508, %v507
        %v547 = vpack.c.b16 %v510, %v509
        %v548 = vpack.c.b16 %v512, %v511
        %v549 = vpack.c.b16 %v514, %v513
        %v550 = vpack.c.b16 %v516, %v515
        %v551 = vpack.c.b16 %v518, %v517
        %v552 = vpack.c.b16 %v520, %v519
        %v553 = vpack.c.b16 %v522, %v521
        %v554 = vpack.c.b16 %v524, %v523
        %v555 = vpack.c.b16 %v526, %v525
        %v556 = vpack.c.b16 %v528, %v527
        %v557 = vpack.c.b16 %v530, %v529
        %v558 = vpack.c.b16 %v532, %v531
        %v559 = vpack.c.b16 %v534, %v533
        %v560 = vpack.c.b16 %v536, %v535
        %585 = vmatprep.subr.bf16.mxu0 0
        %586 = vmatpush1.bf16.msra.mxu0 %v537
        %587 = vmatprep.subr.bf16.mxu0 0
        %588 = vmatpush1.bf16.msra.mxu0 %v538
        %589 = vmatprep.subr.bf16.mxu0 0
        %590 = vmatpush1.bf16.msra.mxu0 %v539
        %591 = vmatprep.subr.bf16.mxu0 0
        %592 = vmatpush1.bf16.msra.mxu0 %v540
        %593 = vmatprep.subr.bf16.mxu0 0
        %594 = vmatpush1.bf16.msra.mxu0 %v541
        %595 = vmatprep.subr.bf16.mxu0 0
        %596 = vmatpush1.bf16.msra.mxu0 %v542
        %597 = vmatprep.subr.bf16.mxu0 0
        %598 = vmatpush1.bf16.msra.mxu0 %v543
        %599 = vmatprep.subr.bf16.mxu0 0
        %600 = vmatpush1.bf16.msra.mxu0 %v544
        %601 = vmatprep.subr.bf16.mxu0 0
        %602 = vmatpush1.bf16.msra.mxu0 %v545
        %603 = vmatprep.subr.bf16.mxu0 0
        %604 = vmatpush1.bf16.msra.mxu0 %v546
        %605 = vmatprep.subr.bf16.mxu0 0
        %606 = vmatpush1.bf16.msra.mxu0 %v547
        %607 = vmatprep.subr.bf16.mxu0 0
        %608 = vmatpush1.bf16.msra.mxu0 %v548
        %609 = vmatprep.subr.bf16.mxu0 0
        %610 = vmatpush1.bf16.msra.mxu0 %v549
        %611 = vmatprep.subr.bf16.mxu0 0
        %612 = vmatpush1.bf16.msra.mxu0 %v550
        %613 = vmatprep.subr.bf16.mxu0 0
        %614 = vmatpush1.bf16.msra.mxu0 %v551
        %615 = vmatprep.subr.bf16.mxu0 0
        %616 = vmatpush1.bf16.msra.mxu0 %v552
        %617 = vmatprep.mubr.bf16.mxu0 %v377
        %618 = vmatmul.mubr.bf16.gmra.mrb[0].mxu0 %v370
        %v619 = vpop.f32.mrb[0].mxu0
        %v620 = vadd.f32 %v439, %v619
        %v621 = vpop.f32.mrb[0].mxu0
        %v622 = vpop.f32.mrb[0].mxu0
        %v623 = vadd.f32 %v439, %v622
        %v624 = vpop.f32.mrb[0].mxu0
        %625 = vmatprep.mubr.bf16.mxu0 %v376
        %626 = vmatmul.mubr.bf16.gmra.mrb[0].mxu0 %v371
        %v627 = vpop.f32.mrb[0].mxu0
        %v628 = vadd.f32 %v439, %v627
        %v629 = vpop.f32.mrb[0].mxu0
        %v630 = vpop.f32.mrb[0].mxu0
        %v631 = vpop.f32.mrb[0].mxu0
        %632 = vdwg.mxu0
        %633 = vmatprep.subr.bf16.mxu0 0
        %634 = vmatpush1.bf16.msra.mxu0 %v553
        %635 = vmatprep.subr.bf16.mxu0 0
        %636 = vmatpush1.bf16.msra.mxu0 %v554
        %637 = vmatprep.subr.bf16.mxu0 0
        %638 = vmatpush1.bf16.msra.mxu0 %v555
        %639 = vmatprep.subr.bf16.mxu0 0
        %640 = vmatpush1.bf16.msra.mxu0 %v556
        %641 = vmatprep.subr.bf16.mxu0 0
        %642 = vmatpush1.bf16.msra.mxu0 %v557
        %643 = vmatprep.subr.bf16.mxu0 0
        %644 = vmatpush1.bf16.msra.mxu0 %v558
        %645 = vmatprep.subr.bf16.mxu0 0
        %646 = vmatpush1.bf16.msra.mxu0 %v559
        %647 = vmatprep.subr.bf16.mxu0 0
        %648 = vmatpush1.bf16.msra.mxu0 %v560
        %649 = vmatprep.subr.bf16.mxu0 0
        %650 = vmatpush1.bf16.msra.mxu0 0
        %651 = vmatprep.subr.bf16.mxu0 0
        %652 = vmatpush1.bf16.msra.mxu0 0
        %653 = vmatprep.subr.bf16.mxu0 0
        %654 = vmatpush1.bf16.msra.mxu0 0
        %655 = vmatprep.subr.bf16.mxu0 0
        %656 = vmatpush1.bf16.msra.mxu0 0
        %657 = vmatprep.subr.bf16.mxu0 0
        %658 = vmatpush1.bf16.msra.mxu0 0
        %659 = vmatprep.subr.bf16.mxu0 0
        %660 = vmatpush1.bf16.msra.mxu0 0
        %661 = vmatprep.subr.bf16.mxu0 0
        %662 = vmatpush1.bf16.msra.mxu0 0
        %663 = vmatprep.subr.bf16.mxu0 0
        %664 = vmatpush1.bf16.msra.mxu0 0
        %665 = vmatprep.mubr.bf16.mxu0 0
        %666 = vmatmul.mubr.bf16.gmra.mrb[0].mxu0 %v383
        %v667 = vpop.f32.mrb[0].mxu0
        %v668 = vadd.f32 %v620, %v667
        %v669 = vpop.f32.mrb[0].mxu0
        %v670 = vpop.f32.mrb[0].mxu0
        %v671 = vadd.f32 %v623, %v670
        %v672 = vpop.f32.mrb[0].mxu0
        %673 = vmatprep.mubr.bf16.mxu0 0
        %674 = vmatmul.mubr.bf16.gmra.mrb[0].mxu0 %v382
        %v675 = vpop.f32.mrb[0].mxu0
        %v676 = vadd.f32 %v628, %v675
        %v677 = vpop.f32.mrb[0].mxu0
        %v678 = vpop.f32.mrb[0].mxu0
        %v679 = vpop.f32.mrb[0].mxu0
        %680 = vdwg.mxu0
        %v681 = vmax.f32 %v668, 0.0
        %v682 = vmax.f32 %v671, 0.0
        %v683 = vmax.f32 %v676, 0.0
        %v684 = vlaneseq
        %v685 = vshrl.u32 %v684, 7
        %v686 = vadd.s32 %v685, 8
        %v687 = vadd.s32 %v685, 16
        %s688 = smul.u32 %s31, 16
        %s689 = ssub.s32 %s688, 2
        %v690 = vstv %s689
        %v691 = vadd.s32 %v685, %v690
        %v692 = vadd.s32 %v686, %v690
        %v693 = vadd.s32 %v687, %v690
        %vm694 = vcmp.ge.s32.totalorder %v691, 0
        %vm695 = vcmp.ge.s32.totalorder %v692, 0
        %vm696 = vcmp.ge.s32.totalorder %v693, 0
        %vm697 = vcmp.lt.s32.totalorder %v691, 16
        %vm698 = vcmp.lt.s32.totalorder %v692, 16
        %vm699 = vcmp.lt.s32.totalorder %v693, 16
        %vm700 = vmand %vm694, %vm697
        %vm701 = vmand %vm695, %vm698
        %vm702 = vmand %vm696, %vm699
        %v703 = vsel %vm700, %v681, 0.0
        %v704 = vsel %vm701, %v682, 0.0
        %v705 = vsel %vm702, %v683, 0.0
        %v706 = vld [vmem:[#allocation8] sm:$0xf]
        %v707 = vld [vmem:[#allocation8 + $0x4] sm:$0xf]
        %v708 = vld [vmem:[#allocation8 + $0x8] sm:$0xf]
        %v709 = vld [vmem:[#allocation8 + $0xc] sm:$0xf]
        %v710 = vld [vmem:[#allocation8 + $0x10] sm:$0xf]
        %v711 = vld [vmem:[#allocation8 + $0x14] sm:$0xf]
        %v712 = vld [vmem:[#allocation8 + $0x18] sm:$0xf]
        %v713 = vld [vmem:[#allocation8 + $0x1c] sm:$0xf]
        %v714 = vld [vmem:[#allocation8 + $0x20] sm:$0xf]
        %v715 = vld [vmem:[#allocation8 + $0x24] sm:$0xf]
        %v716 = vld [vmem:[#allocation8 + $0x28] sm:$0xf]
        %v717 = vld [vmem:[#allocation8 + $0x2c] sm:$0xf]
        %v718 = vld [vmem:[#allocation8 + $0x30] sm:$0xf]
        %v719 = vld [vmem:[#allocation8 + $0x34] sm:$0xf]
        %v720 = vld [vmem:[#allocation8 + $0x38] sm:$0xf]
        %v721 = vld [vmem:[#allocation8 + $0x3c] sm:$0xf]
        %v722 = vld [vmem:[%s6] sm:$0x1]
        %v724 = vlaneseq
        %v725 = vshrl.u32 %v724, 7
        %v726 = vsub.s32 0, %v725
        %v727 = vrot.slane %v722, %v726
        %v745 = vunpack.c.l.b16 %v706
        %v746 = vunpack.c.l.b16 %v707
        %v747 = vunpack.c.l.b16 %v708
        %v748 = vunpack.c.l.b16 %v709
        %v749 = vunpack.c.l.b16 %v710
        %v750 = vunpack.c.l.b16 %v711
        %v751 = vunpack.c.l.b16 %v712
        %v752 = vunpack.c.l.b16 %v713
        %v753 = vunpack.c.l.b16 %v714
        %v754 = vunpack.c.l.b16 %v715
        %v755 = vunpack.c.l.b16 %v716
        %v756 = vunpack.c.l.b16 %v717
        %v757 = vunpack.c.l.b16 %v718
        %v758 = vunpack.c.l.b16 %v719
        %v759 = vunpack.c.l.b16 %v720
        %v760 = vunpack.c.l.b16 %v721
        %v761 = vpack.c.b16 %v746, %v745
        %v762 = vpack.c.b16 %v748, %v747
        %v763 = vpack.c.b16 %v750, %v749
        %v764 = vpack.c.b16 %v752, %v751
        %v765 = vpack.c.b16 %v754, %v753
        %v766 = vpack.c.b16 %v756, %v755
        %v767 = vpack.c.b16 %v758, %v757
        %v768 = vpack.c.b16 %v760, %v759
        %777 = vmatprep.subr.bf16.mxu0 0
        %778 = vmatpush1.bf16.msra.mxu0 %v761
        %779 = vmatprep.subr.bf16.mxu0 0
        %780 = vmatpush1.bf16.msra.mxu0 %v762
        %781 = vmatprep.subr.bf16.mxu0 0
        %782 = vmatpush1.bf16.msra.mxu0 %v763
        %783 = vmatprep.subr.bf16.mxu0 0
        %784 = vmatpush1.bf16.msra.mxu0 %v764
        %785 = vmatprep.subr.bf16.mxu0 0
        %786 = vmatpush1.bf16.msra.mxu0 %v765
        %787 = vmatprep.subr.bf16.mxu0 0
        %788 = vmatpush1.bf16.msra.mxu0 %v766
        %789 = vmatprep.subr.bf16.mxu0 0
        %790 = vmatpush1.bf16.msra.mxu0 %v767
        %791 = vmatprep.subr.bf16.mxu0 0
        %792 = vmatpush1.bf16.msra.mxu0 %v768
        %793 = vmatprep.subr.bf16.mxu0 0
        %794 = vmatpush1.bf16.msra.mxu0 0
        %795 = vmatprep.subr.bf16.mxu0 0
        %796 = vmatpush1.bf16.msra.mxu0 0
        %797 = vmatprep.subr.bf16.mxu0 0
        %798 = vmatpush1.bf16.msra.mxu0 0
        %799 = vmatprep.subr.bf16.mxu0 0
        %800 = vmatpush1.bf16.msra.mxu0 0
        %801 = vmatprep.subr.bf16.mxu0 0
        %802 = vmatpush1.bf16.msra.mxu0 0
        %803 = vmatprep.subr.bf16.mxu0 0
        %804 = vmatpush1.bf16.msra.mxu0 0
        %805 = vmatprep.subr.bf16.mxu0 0
        %806 = vmatpush1.bf16.msra.mxu0 0
        %807 = vmatprep.subr.bf16.mxu0 0
        %808 = vmatpush1.bf16.msra.mxu0 0
        %809 = vmatprep.mubr.bf16.mxu0 0
        %810 = vmatmul.mubr.bf16.gmra.mrb[0].mxu0 %v383
        %v811 = vpop.f32.mrb[0].mxu0
        %v812 = vadd.f32 %v727, %v811
        %v813 = vpop.f32.mrb[0].mxu0
        %v814 = vpop.f32.mrb[0].mxu0
        %v815 = vadd.f32 %v727, %v814
        %v816 = vpop.f32.mrb[0].mxu0
        %817 = vdwg.mxu0
        %v818 = vpack.c.bf16 %v704, %v703
        %v819 = vpack.c.bf16 %v705, %v705
        %v822 = vrot.slane %v818, 1
        %v823 = vrot.slane %v819, 1
        %v824 = vsel %vm374, %v822, %v823
        %v826 = vrot.slane %v818, 2
        %v827 = vrot.slane %v819, 2
        %v828 = vsel %vm380, %v826, %v827
        %v830 = vld [vmem:[#allocation7] sm:$0xf]
        %v831 = vld [vmem:[#allocation7 + $0x4] sm:$0xf]
        %v832 = vld [vmem:[#allocation7 + $0x8] sm:$0xf]
        %v833 = vld [vmem:[#allocation7 + $0xc] sm:$0xf]
        %v834 = vld [vmem:[#allocation7 + $0x10] sm:$0xf]
        %v835 = vld [vmem:[#allocation7 + $0x14] sm:$0xf]
        %v836 = vld [vmem:[#allocation7 + $0x18] sm:$0xf]
        %v837 = vld [vmem:[#allocation7 + $0x1c] sm:$0xf]
        %v838 = vld [vmem:[#allocation7 + $0x20] sm:$0xf]
        %v839 = vld [vmem:[#allocation7 + $0x24] sm:$0xf]
        %v840 = vld [vmem:[#allocation7 + $0x28] sm:$0xf]
        %v841 = vld [vmem:[#allocation7 + $0x2c] sm:$0xf]
        %v842 = vld [vmem:[#allocation7 + $0x30] sm:$0xf]
        %v843 = vld [vmem:[#allocation7 + $0x34] sm:$0xf]
        %v844 = vld [vmem:[#allocation7 + $0x38] sm:$0xf]
        %v845 = vld [vmem:[#allocation7 + $0x3c] sm:$0xf]
        %v846 = vld [vmem:[#allocation7 + $0x40] sm:$0xf]
        %v847 = vld [vmem:[#allocation7 + $0x44] sm:$0xf]
        %v848 = vld [vmem:[#allocation7 + $0x48] sm:$0xf]
        %v849 = vld [vmem:[#allocation7 + $0x4c] sm:$0xf]
        %v850 = vld [vmem:[#allocation7 + $0x50] sm:$0xf]
        %v851 = vld [vmem:[#allocation7 + $0x54] sm:$0xf]
        %v852 = vld [vmem:[#allocation7 + $0x58] sm:$0xf]
        %v853 = vld [vmem:[#allocation7 + $0x5c] sm:$0xf]
        %v854 = vld [vmem:[#allocation7 + $0x60] sm:$0xf]
        %v855 = vld [vmem:[#allocation7 + $0x64] sm:$0xf]
        %v856 = vld [vmem:[#allocation7 + $0x68] sm:$0xf]
        %v857 = vld [vmem:[#allocation7 + $0x6c] sm:$0xf]
        %v858 = vld [vmem:[#allocation7 + $0x70] sm:$0xf]
        %v859 = vld [vmem:[#allocation7 + $0x74] sm:$0xf]
        %v860 = vld [vmem:[#allocation7 + $0x78] sm:$0xf]
        %v861 = vld [vmem:[#allocation7 + $0x7c] sm:$0xf]
        %v862 = vld [vmem:[#allocation7 + $0x80] sm:$0xf]
        %v863 = vld [vmem:[#allocation7 + $0x84] sm:$0xf]
        %v864 = vld [vmem:[#allocation7 + $0x88] sm:$0xf]
        %v865 = vld [vmem:[#allocation7 + $0x8c] sm:$0xf]
        %v866 = vld [vmem:[#allocation7 + $0x90] sm:$0xf]
        %v867 = vld [vmem:[#allocation7 + $0x94] sm:$0xf]
        %v868 = vld [vmem:[#allocation7 + $0x98] sm:$0xf]
        %v869 = vld [vmem:[#allocation7 + $0x9c] sm:$0xf]
        %v870 = vld [vmem:[#allocation7 + $0xa0] sm:$0xf]
        %v871 = vld [vmem:[#allocation7 + $0xa4] sm:$0xf]
        %v872 = vld [vmem:[#allocation7 + $0xa8] sm:$0xf]
        %v873 = vld [vmem:[#allocation7 + $0xac] sm:$0xf]
        %v874 = vld [vmem:[#allocation7 + $0xb0] sm:$0xf]
        %v875 = vld [vmem:[#allocation7 + $0xb4] sm:$0xf]
        %v876 = vld [vmem:[#allocation7 + $0xb8] sm:$0xf]
        %v877 = vld [vmem:[#allocation7 + $0xbc] sm:$0xf]
        %v878 = vld [vmem:[%s4] sm:$0x1]
        %v880 = vlaneseq
        %v881 = vshrl.u32 %v880, 7
        %v882 = vsub.s32 0, %v881
        %v883 = vrot.slane %v878, %v882
        %v933 = vunpack.c.l.b16 %v830
        %v934 = vunpack.c.l.b16 %v831
        %v935 = vunpack.c.l.b16 %v832
        %v936 = vunpack.c.l.b16 %v833
        %v937 = vunpack.c.l.b16 %v834
        %v938 = vunpack.c.l.b16 %v835
        %v939 = vunpack.c.l.b16 %v836
        %v940 = vunpack.c.l.b16 %v837
        %v941 = vunpack.c.l.b16 %v838
        %v942 = vunpack.c.l.b16 %v839
        %v943 = vunpack.c.l.b16 %v840
        %v944 = vunpack.c.l.b16 %v841
        %v945 = vunpack.c.l.b16 %v842
        %v946 = vunpack.c.l.b16 %v843
        %v947 = vunpack.c.l.b16 %v844
        %v948 = vunpack.c.l.b16 %v845
        %v949 = vunpack.c.l.b16 %v846
        %v950 = vunpack.c.l.b16 %v847
        %v951 = vunpack.c.l.b16 %v848
        %v952 = vunpack.c.l.b16 %v849
        %v953 = vunpack.c.l.b16 %v850
        %v954 = vunpack.c.l.b16 %v851
        %v955 = vunpack.c.l.b16 %v852
        %v956 = vunpack.c.l.b16 %v853
        %v957 = vunpack.c.l.b16 %v854
        %v958 = vunpack.c.l.b16 %v855
        %v959 = vunpack.c.l.b16 %v856
        %v960 = vunpack.c.l.b16 %v857
        %v961 = vunpack.c.l.b16 %v858
        %v962 = vunpack.c.l.b16 %v859
        %v963 = vunpack.c.l.b16 %v860
        %v964 = vunpack.c.l.b16 %v861
        %v965 = vunpack.c.l.b16 %v862
        %v966 = vunpack.c.l.b16 %v863
        %v967 = vunpack.c.l.b16 %v864
        %v968 = vunpack.c.l.b16 %v865
        %v969 = vunpack.c.l.b16 %v866
        %v970 = vunpack.c.l.b16 %v867
        %v971 = vunpack.c.l.b16 %v868
        %v972 = vunpack.c.l.b16 %v869
        %v973 = vunpack.c.l.b16 %v870
        %v974 = vunpack.c.l.b16 %v871
        %v975 = vunpack.c.l.b16 %v872
        %v976 = vunpack.c.l.b16 %v873
        %v977 = vunpack.c.l.b16 %v874
        %v978 = vunpack.c.l.b16 %v875
        %v979 = vunpack.c.l.b16 %v876
        %v980 = vunpack.c.l.b16 %v877
        %v981 = vpack.c.b16 %v934, %v933
        %v982 = vpack.c.b16 %v936, %v935
        %v983 = vpack.c.b16 %v938, %v937
        %v984 = vpack.c.b16 %v940, %v939
        %v985 = vpack.c.b16 %v942, %v941
        %v986 = vpack.c.b16 %v944, %v943
        %v987 = vpack.c.b16 %v946, %v945
        %v988 = vpack.c.b16 %v948, %v947
        %v989 = vpack.c.b16 %v950, %v949
        %v990 = vpack.c.b16 %v952, %v951
        %v991 = vpack.c.b16 %v954, %v953
        %v992 = vpack.c.b16 %v956, %v955
        %v993 = vpack.c.b16 %v958, %v957
        %v994 = vpack.c.b16 %v960, %v959
        %v995 = vpack.c.b16 %v962, %v961
        %v996 = vpack.c.b16 %v964, %v963
        %v997 = vpack.c.b16 %v966, %v965
        %v998 = vpack.c.b16 %v968, %v967
        %v999 = vpack.c.b16 %v970, %v969
        %v1000 = vpack.c.b16 %v972, %v971
        %v1001 = vpack.c.b16 %v974, %v973
        %v1002 = vpack.c.b16 %v976, %v975
        %v1003 = vpack.c.b16 %v978, %v977
        %v1004 = vpack.c.b16 %v980, %v979
        %1029 = vmatprep.subr.bf16.mxu0 0
        %1030 = vmatpush1.bf16.msra.mxu0 %v981
        %1031 = vmatprep.subr.bf16.mxu0 0
        %1032 = vmatpush1.bf16.msra.mxu0 %v982
        %1033 = vmatprep.subr.bf16.mxu0 0
        %1034 = vmatpush1.bf16.msra.mxu0 %v983
        %1035 = vmatprep.subr.bf16.mxu0 0
        %1036 = vmatpush1.bf16.msra.mxu0 %v984
        %1037 = vmatprep.subr.bf16.mxu0 0
        %1038 = vmatpush1.bf16.msra.mxu0 %v985
        %1039 = vmatprep.subr.bf16.mxu0 0
        %1040 = vmatpush1.bf16.msra.mxu0 %v986
        %1041 = vmatprep.subr.bf16.mxu0 0
        %1042 = vmatpush1.bf16.msra.mxu0 %v987
        %1043 = vmatprep.subr.bf16.mxu0 0
        %1044 = vmatpush1.bf16.msra.mxu0 %v988
        %1045 = vmatprep.subr.bf16.mxu0 0
        %1046 = vmatpush1.bf16.msra.mxu0 %v989
        %1047 = vmatprep.subr.bf16.mxu0 0
        %1048 = vmatpush1.bf16.msra.mxu0 %v990
        %1049 = vmatprep.subr.bf16.mxu0 0
        %1050 = vmatpush1.bf16.msra.mxu0 %v991
        %1051 = vmatprep.subr.bf16.mxu0 0
        %1052 = vmatpush1.bf16.msra.mxu0 %v992
        %1053 = vmatprep.subr.bf16.mxu0 0
        %1054 = vmatpush1.bf16.msra.mxu0 %v993
        %1055 = vmatprep.subr.bf16.mxu0 0
        %1056 = vmatpush1.bf16.msra.mxu0 %v994
        %1057 = vmatprep.subr.bf16.mxu0 0
        %1058 = vmatpush1.bf16.msra.mxu0 %v995
        %1059 = vmatprep.subr.bf16.mxu0 0
        %1060 = vmatpush1.bf16.msra.mxu0 %v996
        %1061 = vmatprep.mubr.bf16.mxu0 %v824
        %1062 = vmatmul.mubr.bf16.gmra.mrb[0].mxu0 %v818
        %v1063 = vpop.f32.mrb[0].mxu0
        %v1064 = vadd.f32 %v883, %v1063
        %v1065 = vpop.f32.mrb[0].mxu0
        %v1066 = vpop.f32.mrb[0].mxu0
        %v1067 = vadd.f32 %v883, %v1066
        %v1068 = vpop.f32.mrb[0].mxu0
        %1069 = vdwg.mxu0
        %1070 = vmatprep.subr.bf16.mxu0 0
        %1071 = vmatpush1.bf16.msra.mxu0 %v997
        %1072 = vmatprep.subr.bf16.mxu0 0
        %1073 = vmatpush1.bf16.msra.mxu0 %v998
        %1074 = vmatprep.subr.bf16.mxu0 0
        %1075 = vmatpush1.bf16.msra.mxu0 %v999
        %1076 = vmatprep.subr.bf16.mxu0 0
        %1077 = vmatpush1.bf16.msra.mxu0 %v1000
        %1078 = vmatprep.subr.bf16.mxu0 0
        %1079 = vmatpush1.bf16.msra.mxu0 %v1001
        %1080 = vmatprep.subr.bf16.mxu0 0
        %1081 = vmatpush1.bf16.msra.mxu0 %v1002
        %1082 = vmatprep.subr.bf16.mxu0 0
        %1083 = vmatpush1.bf16.msra.mxu0 %v1003
        %1084 = vmatprep.subr.bf16.mxu0 0
        %1085 = vmatpush1.bf16.msra.mxu0 %v1004
        %1086 = vmatprep.subr.bf16.mxu0 0
        %1087 = vmatpush1.bf16.msra.mxu0 0
        %1088 = vmatprep.subr.bf16.mxu0 0
        %1089 = vmatpush1.bf16.msra.mxu0 0
        %1090 = vmatprep.subr.bf16.mxu0 0
        %1091 = vmatpush1.bf16.msra.mxu0 0
        %1092 = vmatprep.subr.bf16.mxu0 0
        %1093 = vmatpush1.bf16.msra.mxu0 0
        %1094 = vmatprep.subr.bf16.mxu0 0
        %1095 = vmatpush1.bf16.msra.mxu0 0
        %1096 = vmatprep.subr.bf16.mxu0 0
        %1097 = vmatpush1.bf16.msra.mxu0 0
        %1098 = vmatprep.subr.bf16.mxu0 0
        %1099 = vmatpush1.bf16.msra.mxu0 0
        %1100 = vmatprep.subr.bf16.mxu0 0
        %1101 = vmatpush1.bf16.msra.mxu0 0
        %1102 = vmatprep.mubr.bf16.mxu0 0
        %1103 = vmatmul.mubr.bf16.gmra.mrb[0].mxu0 %v828
        %v1104 = vpop.f32.mrb[0].mxu0
        %v1105 = vadd.f32 %v1064, %v1104
        %v1106 = vpop.f32.mrb[0].mxu0
        %v1107 = vpop.f32.mrb[0].mxu0
        %v1108 = vadd.f32 %v1067, %v1107
        %v1109 = vpop.f32.mrb[0].mxu0
        %1110 = vdwg.mxu0
        %v1111 = vmax.f32 %v1105, 0.0
        %v1112 = vmax.f32 %v1108, 0.0
        %v1113 = vadd.f32 %v1111, %v812
        %v1114 = vadd.f32 %v1112, %v815
        %v1115 = vmax.f32 %v1113, 0.0
        %v1116 = vmax.f32 %v1114, 0.0
        %v1117 = vpack.c.bf16 %v1116, %v1115
        %v1119 = vunpack.c.l.b16 %v1117
        %v1120 = vunpack.c.h.b16 %v1117
        %v1121 = vpack.c.b16 %v1119, %v1119
        %v1122 = vpack.c.b16 %v1120, %v1120
        %1125 = vst [vmem:[%s358] sm:$0xf] %v1121
        %1126 = vst [vmem:[%s358 + $0x4] sm:$0xf] %v1122
        %s1127 = sand.u32 %s202, 1
        %s1128 = scalar_lea.sflag [#allocation4], %s1127
        %s1129 = sand.u32 %s202, 1
        %s1130 = smul.addr %s1129, 8
        %s1131 = scalar_lea.vmem [#allocation10], %s1130
        // Predicated region
        $region65: #{tpu_custom_call.1} parent=47 // pred_check
          %p1132 = pneg %p212
        $region66: #{tpu_custom_call.1} parent=47 // pred_check_branch
          %1134 = sbr.rel (%p1132) target = $region68
        $region67: #{tpu_custom_call.1} parent=47 // pred_region
          %s1135 = smul.u32 2, %s31
          %s1137 = ssub.s32 128, 128
          %1138 = vsyncadd %s1128, %s1137
          %s1139 = smul.addr %s30, 2
          %s1140 = sadd.s32 %s1135, %s1139
          %s1141 = smul.addr %s1140, 64
          %s1142 = scalar_lea.hbm %s7, %s1141
          %s1143 = sshll.u32 %s1131, 4
          %s1144 = int_to_ptr.vmem [resolvable:$true] %s1143
          %1149 = dma.vmem_to_hbm [thread:$0]  %s1144, 128, %s1142, %s1128, 64, 64, 4
        $region68: #{tpu_custom_call.1} parent=47 // pred_fallthru
          _
      $region48: #{tpu_custom_call.1} parent=5 // pred_fallthru
        _
      %p1150 = scmp.le.s32.totalorder 2, %s21
      // Predicated region
      $region69: #{tpu_custom_call.1} parent=5 // pred_check
        %p1151 = pneg %p1150
      $region70: #{tpu_custom_call.1} parent=5 // pred_check_branch
        %1153 = sbr.rel (%p1151) target = $region72
      $region71: #{tpu_custom_call.1} parent=5 // pred_region
        %s1154 = ssub.s32 %s21, 2
        // Predicated region
        $region73: #{tpu_custom_call.1} parent=71 // pred_check
          %p1155 = pneg %p218
        $region74: #{tpu_custom_call.1} parent=71 // pred_check_branch
          %1157 = sbr.rel (%p1155) target = $region76
        $region75: #{tpu_custom_call.1} parent=71 // pred_region
          %s1158 = sand.u32 %s203, 1
          %s1159 = scalar_lea.sflag [#allocation4], %s1158
          %s1160 = sand.u32 %s203, 1
          %s1161 = smul.addr %s1160, 8
          %s1162 = scalar_lea.vmem [#allocation10], %s1161
          %1163 = dma.done %s1159, 128
        $region76: #{tpu_custom_call.1} parent=71 // pred_fallthru
          _
      $region72: #{tpu_custom_call.1} parent=5 // pred_fallthru
        _
    $region6: #{tpu_custom_call.1} parent=1 // loop_footer
      %s25 = sadd.s32 1, %s21
    $region7: #{tpu_custom_call.1} parent=1 // loop_footer_branch
      %20 = sbr.rel target = $region3
    $region8: #{tpu_custom_call.1} parent=1 // loop_exit
      _
    %1164 = vsyncpa [#allocation3], 1
    %s1165 = scalar_lea.sflag [#allocation3], 1
    %1166 = vsyncpa %s1165, 1
    %1167 = vsyncpa [#allocation6], 1
    %1168 = vsyncpa [#allocation9], 1
    %1169 = vsyncpa [#allocation4], 1
    %s1170 = scalar_lea.sflag [#allocation4], 1
    %1171 = vsyncpa %s1170, 1

</llo_original>
